<compile_context>
chip_gen: v7x
topology: tpu7x:2x2x1
jax: 0.10.0
libtpu: 0.0.40
codegen_flags: <defaults>
</compile_context>

<pallas_src>
import math

import jax
import jax.numpy as jnp
from jax import lax
from jax.experimental import pallas as pl
from jax.experimental.pallas import tpu as pltpu


_VMEM_LIMIT_BYTES = 32 * 1024 * 1024    # scoped limit requested; safe on v5e/v6e/v7x
_VMEM_BUDGET_BYTES = 24 * 1024 * 1024   # planning budget with headroom under the limit
_SUB_ROWS_MAX = 256                     # packed rows per in-kernel sub-chunk
# Below this batch size a single XLA fusion beats custom-call + per-step overhead.
# Heuristic per perf review (16K-64K range); tune by measurement on the target chip.
_PALLAS_MIN_BATCH = 16384


def _round_up(n, m):
    return ((n + m - 1) // m) * m


def _choose_pack(dim_obs, dim_act, max_pack=32):
    """Smallest row-pack factor making both input and output lane-dense (x128)."""
    p_obs = 128 // math.gcd(dim_obs, 128)
    p_act = 128 // math.gcd(dim_act, 128)
    pack = p_obs * p_act // math.gcd(p_obs, p_act)
    return pack if pack <= max_pack else None


def _reference_forward(x, w1, b1, w2, b2):
    h = jnp.maximum(
        jnp.dot(x, w1, precision=lax.Precision.HIGHEST) + b1.reshape(1, -1), 0.0)
    o = jnp.dot(h, w2, precision=lax.Precision.HIGHEST) + b2.reshape(1, -1)
    return jnp.clip(jnp.tanh(o), -0.9999, 0.9999)


def _make_actor_kernel(sub_rows):
    """Kernel over one (tile_rows, pack*dim_obs) batch tile, sub-chunked to bound
    the live range of the (sub_rows, pack*H) hidden activation."""

    def kernel(x_ref, w1_ref, b1_ref, w2_ref, b2_ref, out_ref):
        n_sub = x_ref.shape[0] // sub_rows  # exact by wrapper construction

        def body(i, carry):
            r0 = pl.multiple_of(i * sub_rows, sub_rows)
            x = x_ref[pl.ds(r0, sub_rows), :]
            h = jnp.dot(x, w1_ref[...], preferred_element_type=jnp.float32)
            h = jnp.maximum(h + b1_ref[...], 0.0)                      # ReLU (VPU)
            o = jnp.dot(h, w2_ref[...], preferred_element_type=jnp.float32)
            o = jnp.tanh(o + b2_ref[...])                              # Tanh (EUP)
            # Clamp *after* casting so |out| < 1 also holds for low-precision outputs.
            o = jnp.clip(o.astype(out_ref.dtype), -0.9999, 0.9999)
            out_ref[pl.ds(r0, sub_rows), :] = o
            return carry

        lax.fori_loop(0, n_sub, body, 0)

    return kernel


def actor_net_small_forward(x, w1, b1, w2, b2, *, block_b=32768, use_pallas=None):
    """Fused MLP forward. x:(B, dim_obs), w1:(dim_obs,H), b1:(1,H)/(H,),
    w2:(H, dim_act), b2:(1,dim_act)/(dim_act,). Returns (out:(B, dim_act), None)."""
    B, dim_obs = x.shape
    H = w1.shape[1]
    dim_act = w2.shape[1]
    b1 = b1.reshape(1, H)
    b2 = b2.reshape(1, dim_act)

    pack = _choose_pack(dim_obs, dim_act)

    if use_pallas is None:
        use_pallas = B >= _PALLAS_MIN_BATCH
    if not use_pallas or pack is None:
        # Tiny problems or lane-unfriendly dims: let XLA fuse it (dispatch overhead
        # would dominate / packed weights would not exist).
        return _reference_forward(x, w1, b1, w2, b2), None

    in_l, hid_l, out_l = dim_obs * pack, H * pack, dim_act * pack

    # VMEM accounting (f32): double-buffered weights + I/O tiles + sub-chunk temps.
    itemsize = 4
    weight_bytes = 2 * itemsize * (in_l * hid_l + hid_l * out_l + hid_l + out_l)
    scratch_bytes = itemsize * _SUB_ROWS_MAX * (in_l + 2 * hid_l + 2 * out_l)
    io_bytes_per_row = 2 * itemsize * (in_l + out_l)
    if weight_bytes + scratch_bytes + 8 * io_bytes_per_row > _VMEM_BUDGET_BYTES:
        # Packed weights too large to keep VMEM-resident at this hidden size.
        return _reference_forward(x, w1, b1, w2, b2), None

    # Pad only to a multiple of `pack` (<= pack-1 rows) so the lane-dense reshape is a
    # pure bitcast; tile-level raggedness is handled by the grid, not by padding.
    rem = B % pack
    x_in = jnp.pad(x, ((0, pack - rem), (0, 0))) if rem else x
    b_pad = x_in.shape[0]
    rows = b_pad // pack
    x_r = x_in.reshape(rows, in_l)

    # Block-diagonal weight / tiled bias repack (tiny; built once per call).
    eye = jnp.eye(pack, dtype=w1.dtype)
    w1_big = jnp.kron(eye, w1)            # (in_l, hid_l)
    w2_big = jnp.kron(eye, w2)            # (hid_l, out_l)
    b1_big = jnp.tile(b1, (1, pack))      # (1, hid_l)
    b2_big = jnp.tile(b2, (1, pack))      # (1, out_l)

    # Batch tile (packed rows): as large as the VMEM budget allows, but keep >= 2 grid
    # steps so both v7x TensorCores get work on the "parallel" batch axis.
    tr = max(8, _round_up(max(block_b, pack) // pack, 8))
    tr_budget = max(8, ((_VMEM_BUDGET_BYTES - weight_bytes - scratch_bytes)
                        // io_bytes_per_row) // 8 * 8)
    tr = min(tr, tr_budget)
    tr = min(tr, _round_up(pl.cdiv(rows, 2), 8))   # >= 2 tiles whenever rows > 8
    tr = min(tr, _round_up(rows, 8))
    # Largest sub-chunk (multiple of 8, <= _SUB_ROWS_MAX) that divides the tile.
    sub = next(s for s in (_SUB_ROWS_MAX, 128, 64, 32, 16, 8) if tr % s == 0)

    grid = (pl.cdiv(rows, tr),)            # ragged last block handled by Pallas masking

    out_r = pl.pallas_call(
        _make_actor_kernel(sub),
        out_shape=jax.ShapeDtypeStruct((rows, out_l), x.dtype),
        grid=grid,
        in_specs=[
            # Batch-tiled activations: new block each step (pipelined DMA).
            pl.BlockSpec((tr, in_l), lambda i: (i, 0)),
            # Weights / biases: constant block index -> VMEM-resident across tiles.
            pl.BlockSpec((in_l, hid_l), lambda i: (0, 0)),
            pl.BlockSpec((1, hid_l), lambda i: (0, 0)),
            pl.BlockSpec((hid_l, out_l), lambda i: (0, 0)),
            pl.BlockSpec((1, out_l), lambda i: (0, 0)),
        ],
        out_specs=pl.BlockSpec((tr, out_l), lambda i: (i, 0)),
        compiler_params=pltpu.CompilerParams(
            dimension_semantics=("parallel",),     # shard tiles across TCs on v7x
            vmem_limit_bytes=_VMEM_LIMIT_BYTES,
        ),
    )(x_r, w1_big, b1_big, w2_big, b2_big)

    out = out_r.reshape(b_pad, dim_act)    # contiguous reshape back: bitcast
    if rem:
        out = out[:B]
    # PyTorch forward returns a tuple (out, None)
    return out, None


def init_params(key, dim_obs, dim_act, n_hidden):
    """Deterministic init mimicking nn.Linear (uniform +/- 1/sqrt(fan_in))."""
    k1, k2, k3, k4 = jax.random.split(key, 4)
    lim1 = 1.0 / jnp.sqrt(jnp.float32(dim_obs))
    lim2 = 1.0 / jnp.sqrt(jnp.float32(n_hidden))
    w1 = jax.random.uniform(k1, (dim_obs, n_hidden), jnp.float32, -lim1, lim1)
    b1 = jax.random.uniform(k2, (1, n_hidden), jnp.float32, -lim1, lim1)
    w2 = jax.random.uniform(k3, (n_hidden, dim_act), jnp.float32, -lim2, lim2)
    b2 = jax.random.uniform(k4, (1, dim_act), jnp.float32, -lim2, lim2)
    return w1, b1, w2, b2


if __name__ == "__main__":
    # Shapes consistent with the module: dim_obs=(16,), dim_act=(8,), hidden=32.
    dim_obs, dim_act, n_hidden = 16, 8, 32

    key = jax.random.PRNGKey(0)
    kx1, kx2, kx3, kp = jax.random.split(key, 4)
    w1, b1, w2, b2 = init_params(kp, dim_obs, dim_act, n_hidden)

    # 1) Tiny batch: default dispatch takes the XLA fallback path.
    x_small = jax.random.normal(kx1, (8, dim_obs), jnp.float32)
    out_s, aux_s = actor_net_small_forward(x_small, w1, b1, w2, b2)
    out_s = jax.block_until_ready(out_s)
    ref_s = _reference_forward(x_small, w1, b1, w2, b2)
    assert aux_s is None and out_s.shape == (8, dim_act)
    assert jnp.allclose(out_s, ref_s, atol=1e-3, rtol=1e-3)

    # 2) Pallas path, batch a multiple of pack (16): lane-dense kernel, 2 grid steps.
    x_med = jax.random.normal(kx2, (4096, dim_obs), jnp.float32)
    out_m, aux_m = actor_net_small_forward(x_med, w1, b1, w2, b2, use_pallas=True)
    out_m = jax.block_until_ready(out_m)
    ref_m = _reference_forward(x_med, w1, b1, w2, b2)
    assert aux_m is None and out_m.shape == (4096, dim_act)
    assert jnp.allclose(out_m, ref_m, atol=1e-3, rtol=1e-3)

    # 3) Pallas path, ragged batch (not a multiple of pack or tile): exercises the
    #    <=15-row pack pad plus the masked ragged last grid block.
    x_rag = jax.random.normal(kx3, (1000, dim_obs), jnp.float32)
    out_r, aux_r = actor_net_small_forward(x_rag, w1, b1, w2, b2, use_pallas=True)
    out_r = jax.block_until_ready(out_r)
    ref_r = _reference_forward(x_rag, w1, b1, w2, b2)
    assert aux_r is None and out_r.shape == (1000, dim_act)
    assert jnp.allclose(out_r, ref_r, atol=1e-3, rtol=1e-3)

    print("KERNEL_OK")
</pallas_src>

<mosaic_0001>
module attributes {stable_mosaic.version = 11 : i64} {
  func.func @kernel(%arg0: i32, %arg1: memref<128x256xf32, #tpu.memory_space<vmem>>, %arg2: memref<256x512xf32, #tpu.memory_space<vmem>>, %arg3: memref<1x512xf32, #tpu.memory_space<vmem>>, %arg4: memref<512x128xf32, #tpu.memory_space<vmem>>, %arg5: memref<1x128xf32, #tpu.memory_space<vmem>>, %arg6: memref<128x128xf32, #tpu.memory_space<vmem>>) attributes {dimension_semantics = [#tpu.dimension_semantics<parallel>], iteration_bounds = array<i64: 2>, scalar_prefetch = 0 : i64, scratch_operands = 0 : i64, tpu.core_type = #tpu.core_type<tc>, window_params = [{transform_indices = @transform_0, window_bounds = array<i64: 128, 256>}, {pipeline_mode = #tpu.pipeline_mode<synchronous>, transform_indices = @transform_1, window_bounds = array<i64: 256, 512>}, {pipeline_mode = #tpu.pipeline_mode<synchronous>, transform_indices = @transform_2, window_bounds = array<i64: 1, 512>}, {pipeline_mode = #tpu.pipeline_mode<synchronous>, transform_indices = @transform_3, window_bounds = array<i64: 512, 128>}, {pipeline_mode = #tpu.pipeline_mode<synchronous>, transform_indices = @transform_4, window_bounds = array<i64: 1, 128>}, {transform_indices = @transform_5, window_bounds = array<i64: 128, 128>}]} {
    %c0_i32 = arith.constant 0 : i32
    %c128_i32 = arith.constant 128 : i32
    %0 = arith.muli %c0_i32, %c128_i32 : i32
    %1 = tpu.assume_multiple %0, 128 : i32
    %2 = arith.index_cast %1 : i32 to index
    %c0 = arith.constant 0 : index
    %3 = vector.load %arg1[%2, %c0] : memref<128x256xf32, #tpu.memory_space<vmem>>, vector<128x256xf32>
    %c0_0 = arith.constant 0 : index
    %c0_1 = arith.constant 0 : index
    %4 = vector.load %arg2[%c0_0, %c0_1] : memref<256x512xf32, #tpu.memory_space<vmem>>, vector<256x512xf32>
    %cst = arith.constant dense<0.000000e+00> : vector<128x512xf32>
    %5 = tpu.matmul %3, %4, %cst {dimension_numbers = #tpu.dot_dimension_numbers<[1], [0], [0], [1], [0, 0, 1, 1], [], []>} : vector<128x256xf32>, vector<256x512xf32>, vector<128x512xf32> -> vector<128x512xf32>
    %c0_2 = arith.constant 0 : index
    %c0_3 = arith.constant 0 : index
    %6 = vector.load %arg3[%c0_2, %c0_3] : memref<1x512xf32, #tpu.memory_space<vmem>>, vector<1x512xf32>
    %7 = vector.broadcast %6 : vector<1x512xf32> to vector<128x512xf32>
    %8 = arith.addf %5, %7 : vector<128x512xf32>
    %cst_4 = arith.constant 0.000000e+00 : f32
    %9 = vector.broadcast %cst_4 : f32 to vector<128x512xf32>
    %10 = arith.maximumf %8, %9 : vector<128x512xf32>
    %c0_5 = arith.constant 0 : index
    %c0_6 = arith.constant 0 : index
    %11 = vector.load %arg4[%c0_5, %c0_6] : memref<512x128xf32, #tpu.memory_space<vmem>>, vector<512x128xf32>
    %cst_7 = arith.constant dense<0.000000e+00> : vector<128x128xf32>
    %12 = tpu.matmul %10, %11, %cst_7 {dimension_numbers = #tpu.dot_dimension_numbers<[1], [0], [0], [1], [0, 0, 1, 1], [], []>} : vector<128x512xf32>, vector<512x128xf32>, vector<128x128xf32> -> vector<128x128xf32>
    %c0_8 = arith.constant 0 : index
    %c0_9 = arith.constant 0 : index
    %13 = vector.load %arg5[%c0_8, %c0_9] : memref<1x128xf32, #tpu.memory_space<vmem>>, vector<1x128xf32>
    %14 = vector.broadcast %13 : vector<1x128xf32> to vector<128x128xf32>
    %15 = arith.addf %12, %14 : vector<128x128xf32>
    %16 = math.tanh %15 : vector<128x128xf32>
    %cst_10 = arith.constant -0.999899983 : f32
    %cst_11 = arith.constant 0.999899983 : f32
    %17 = vector.broadcast %cst_10 : f32 to vector<128x128xf32>
    %18 = arith.maximumf %17, %16 : vector<128x128xf32>
    %19 = vector.broadcast %cst_11 : f32 to vector<128x128xf32>
    %20 = arith.minimumf %19, %18 : vector<128x128xf32>
    %21 = arith.index_cast %1 : i32 to index
    %c0_12 = arith.constant 0 : index
    %22 = vector.load %arg6[%21, %c0_12] : memref<128x128xf32, #tpu.memory_space<vmem>>, vector<128x128xf32>
    tpu.vector_store %arg6[%21, %c0_12], %20 {strides = array<i32>} : memref<128x128xf32, #tpu.memory_space<vmem>>, vector<128x128xf32>,
    %c1_i32 = arith.constant 1 : i32
    return
  }
  func.func @transform_0(%arg0: i32) -> (i32, i32) {
    %c0_i32 = arith.constant 0 : i32
    %c0_i32_0 = arith.constant 0 : i32
    return %arg0, %c0_i32 : i32, i32
  }
  func.func @transform_1(%arg0: i32) -> (i32, i32) {
    %c0_i32 = arith.constant 0 : i32
    %c0_i32_0 = arith.constant 0 : i32
    %c0_i32_1 = arith.constant 0 : i32
    return %c0_i32, %c0_i32_0 : i32, i32
  }
  func.func @transform_2(%arg0: i32) -> (i32, i32) {
    %c0_i32 = arith.constant 0 : i32
    %c0_i32_0 = arith.constant 0 : i32
    %c0_i32_1 = arith.constant 0 : i32
    return %c0_i32, %c0_i32_0 : i32, i32
  }
  func.func @transform_3(%arg0: i32) -> (i32, i32) {
    %c0_i32 = arith.constant 0 : i32
    %c0_i32_0 = arith.constant 0 : i32
    %c0_i32_1 = arith.constant 0 : i32
    return %c0_i32, %c0_i32_0 : i32, i32
  }
  func.func @transform_4(%arg0: i32) -> (i32, i32) {
    %c0_i32 = arith.constant 0 : i32
    %c0_i32_0 = arith.constant 0 : i32
    %c0_i32_1 = arith.constant 0 : i32
    return %c0_i32, %c0_i32_0 : i32, i32
  }
  func.func @transform_5(%arg0: i32) -> (i32, i32) {
    %c0_i32 = arith.constant 0 : i32
    %c0_i32_0 = arith.constant 0 : i32
    return %arg0, %c0_i32 : i32, i32
  }
}

</mosaic_0001>

<llo_original>
// kernel: tpu_custom_call.1
$region0: #{tpu_custom_call.1}
  #allocation0 [shape = 'u32[]', space=smem, size = 0x4, offset = 0x4, fixed_abs, tag = 'smem constant byte address 0x4 - core index']
  #allocation1 [shape = 'u32[144,128]{1,0:T(1,128)}', space=vmem, size = 0x12000, scoped, tag = 'internal scratch']
  %s0 = inlined_call_operand.hbm [shape: f32[256,256], index: 0, kind: input, shape index: {}]
  %s1 = inlined_call_operand.hbm [shape: f32[256,512], index: 1, kind: input, shape index: {}]
  %s2 = inlined_call_operand.vmem [shape: f32[1,512], index: 2, kind: input, shape index: {}]
  %s3 = inlined_call_operand.hbm [shape: f32[512,128], index: 3, kind: input, shape index: {}]
  %s4 = inlined_call_operand.vmem [shape: f32[1,128], index: 4, kind: input, shape index: {}]
  %s5 = inlined_call_operand.hbm [shape: f32[256,128], index: 5, kind: output, shape index: {}]
  %s6 = sld [smem:[#allocation0]]
  $region65: #{tpu_custom_call.1} parent=0
    _
  %s8 = ssub.s32 1, %s6
  %s9 = scalar_select 0, %s8, %s6
  $region1: #{tpu_custom_call.1} parent=0
    #allocation2 [shape = 'u8[262144]{0}', space=vmem, size = 0x40000, scoped, tag = 'input window, operand 0']
    #allocation3 [shape = 's32[2]{0}', space=sflag, size = 0x8, scoped, tag = 'scoped memory for tpu_custom_call.1']
    #allocation4 [shape = 's32[2]{0}', space=sflag, size = 0x8, scoped, tag = 'scoped memory for tpu_custom_call.1']
    #allocation5 [shape = 'u8[524288]{0}', space=vmem, size = 0x80000, scoped, tag = 'input window, operand 1, single buffered']
    #allocation6 [shape = 's32[1]{0}', space=sflag, size = 0x4, scoped, tag = 'scoped memory for tpu_custom_call.1']
    #allocation7 [shape = 'u8[262144]{0}', space=vmem, size = 0x40000, scoped, tag = 'input window, operand 3, single buffered']
    #allocation8 [shape = 'u8[131072]{0}', space=vmem, size = 0x20000, scoped, tag = 'output window, operand 0']
    %10 = vsyncpa [#allocation3], 0
    %s11 = scalar_lea.sflag [#allocation3], 1
    %12 = vsyncpa %s11, 0
    %13 = vsyncpa [#allocation6], 0
    %14 = vsyncpa [#allocation4], 0
    %s15 = scalar_lea.sflag [#allocation4], 1
    %16 = vsyncpa %s15, 0
    loop: start=0, step=1, limit=4
    $region2: #{tpu_custom_call.1} parent=1 // loop_pre_header
      _
    $region3: #{tpu_custom_call.1} parent=1 // loop_header
      %s18 = sphi 0, %s22
      %p19 = scmp.ge.s32.totalorder %s18, 4
      %s28 = sphi 0, %s30
      %s31 = sphi 0, %s28
      %s32 = sphi 0, %s31
      %s48 = sphi 0, %s32
      %s52 = sphi 0, %s52
      %s54 = sphi 0, %s52
      %s55 = sphi 0, %s54
      %s69 = sphi 0, %s55
      %s73 = sphi 0, %s73
      %s75 = sphi 0, %s73
      %s76 = sphi 0, %s75
      %s90 = sphi 0, %s76
      %s94 = sphi 0, %s94
      %s96 = sphi 0, %s94
      %s97 = sphi 0, %s96
      %s111 = sphi 0, %s97
      %s115 = sphi 0, %s115
      %s117 = sphi 0, %s115
      %s118 = sphi 0, %s117
      %s132 = sphi 0, %s118
      %s138 = sphi 0, %s140
      %s141 = sphi 0, %s138
      %s142 = sphi 0, %s141
      %s158 = sphi 0, %s142
    $region4: #{tpu_custom_call.1} parent=1 // loop_header_branch
      %21 = sbr.rel (%p19) target = $region8
    $region5: #{tpu_custom_call.1} parent=1 // loop_body
      %s23 = ssub.s32 %s18, 1
      %s24 = ssub.s32 %s18, 2
      %s25 = sadd.s32 %s18, 1
      %s26 = ssub.s32 %s18, %s25
      %p27 = scmp.eq.s32.totalorder %s26, 0
      %s29 = sadd.s32 %s28, 1
      %s30 = scalar_select %p27, %s28, %s29
      %p33 = pneg %p27
      %p34 = scmp.eq.s32.totalorder %s18, 1
      %p35 = por %p33, %p34
      %p36 = scmp.ne.s32.totalorder %s28, %s31
      %p37 = scmp.eq.s32.totalorder %s18, 0
      %p38 = por %p36, %p37
      %p39 = scmp.ne.s32.totalorder %s28, %s31
      %p40 = scmp.eq.s32.totalorder %s23, 1
      %p41 = por %p39, %p40
      %p42 = scmp.ne.s32.totalorder %s31, %s32
      %p43 = scmp.eq.s32.totalorder %s23, 0
      %p44 = por %p42, %p43
      %p45 = scmp.ne.s32.totalorder %s31, %s32
      %p46 = scmp.eq.s32.totalorder %s24, 1
      %p47 = por %p45, %p46
      %p49 = scmp.ne.s32.totalorder %s32, %s48
      %p50 = scmp.eq.s32.totalorder %s24, 0
      %p51 = por %p49, %p50
      %s53 = sadd.s32 %s52, 1
      %p56 = scmp.eq.s32.totalorder %s18, 1
      %p57 = scmp.ne.s32.totalorder %s52, %s54
      %p58 = scmp.eq.s32.totalorder %s18, 0
      %p59 = por %p57, %p58
      %p60 = scmp.ne.s32.totalorder %s52, %s54
      %p61 = scmp.eq.s32.totalorder %s23, 1
      %p62 = por %p60, %p61
      %p63 = scmp.ne.s32.totalorder %s54, %s55
      %p64 = scmp.eq.s32.totalorder %s23, 0
      %p65 = por %p63, %p64
      %p66 = scmp.ne.s32.totalorder %s54, %s55
      %p67 = scmp.eq.s32.totalorder %s24, 1
      %p68 = por %p66, %p67
      %p70 = scmp.ne.s32.totalorder %s55, %s69
      %p71 = scmp.eq.s32.totalorder %s24, 0
      %p72 = por %p70, %p71
      %s74 = sadd.s32 %s73, 1
      %p77 = scmp.eq.s32.totalorder %s18, 1
      %p78 = scmp.ne.s32.totalorder %s73, %s75
      %p79 = scmp.eq.s32.totalorder %s18, 0
      %p80 = por %p78, %p79
      %p81 = scmp.ne.s32.totalorder %s73, %s75
      %p82 = scmp.eq.s32.totalorder %s23, 1
      %p83 = por %p81, %p82
      %p84 = scmp.ne.s32.totalorder %s75, %s76
      %p85 = scmp.eq.s32.totalorder %s23, 0
      %p86 = por %p84, %p85
      %p87 = scmp.ne.s32.totalorder %s75, %s76
      %p88 = scmp.eq.s32.totalorder %s24, 1
      %p89 = por %p87, %p88
      %p91 = scmp.ne.s32.totalorder %s76, %s90
      %p92 = scmp.eq.s32.totalorder %s24, 0
      %p93 = por %p91, %p92
      %s95 = sadd.s32 %s94, 1
      %p98 = scmp.eq.s32.totalorder %s18, 1
      %p99 = scmp.ne.s32.totalorder %s94, %s96
      %p100 = scmp.eq.s32.totalorder %s18, 0
      %p101 = por %p99, %p100
      %p102 = scmp.ne.s32.totalorder %s94, %s96
      %p103 = scmp.eq.s32.totalorder %s23, 1
      %p104 = por %p102, %p103
      %p105 = scmp.ne.s32.totalorder %s96, %s97
      %p106 = scmp.eq.s32.totalorder %s23, 0
      %p107 = por %p105, %p106
      %p108 = scmp.ne.s32.totalorder %s96, %s97
      %p109 = scmp.eq.s32.totalorder %s24, 1
      %p110 = por %p108, %p109
      %p112 = scmp.ne.s32.totalorder %s97, %s111
      %p113 = scmp.eq.s32.totalorder %s24, 0
      %p114 = por %p112, %p113
      %s116 = sadd.s32 %s115, 1
      %p119 = scmp.eq.s32.totalorder %s18, 1
      %p120 = scmp.ne.s32.totalorder %s115, %s117
      %p121 = scmp.eq.s32.totalorder %s18, 0
      %p122 = por %p120, %p121
      %p123 = scmp.ne.s32.totalorder %s115, %s117
      %p124 = scmp.eq.s32.totalorder %s23, 1
      %p125 = por %p123, %p124
      %p126 = scmp.ne.s32.totalorder %s117, %s118
      %p127 = scmp.eq.s32.totalorder %s23, 0
      %p128 = por %p126, %p127
      %p129 = scmp.ne.s32.totalorder %s117, %s118
      %p130 = scmp.eq.s32.totalorder %s24, 1
      %p131 = por %p129, %p130
      %p133 = scmp.ne.s32.totalorder %s118, %s132
      %p134 = scmp.eq.s32.totalorder %s24, 0
      %p135 = por %p133, %p134
      %s136 = ssub.s32 %s18, %s25
      %p137 = scmp.eq.s32.totalorder %s136, 0
      %s139 = sadd.s32 %s138, 1
      %s140 = scalar_select %p137, %s138, %s139
      %p143 = pneg %p137
      %p144 = scmp.eq.s32.totalorder %s18, 1
      %p145 = por %p143, %p144
      %p146 = scmp.ne.s32.totalorder %s138, %s141
      %p147 = scmp.eq.s32.totalorder %s18, 0
      %p148 = por %p146, %p147
      %p149 = scmp.ne.s32.totalorder %s138, %s141
      %p150 = scmp.eq.s32.totalorder %s23, 1
      %p151 = por %p149, %p150
      %p152 = scmp.ne.s32.totalorder %s141, %s142
      %p153 = scmp.eq.s32.totalorder %s23, 0
      %p154 = por %p152, %p153
      %p155 = scmp.ne.s32.totalorder %s141, %s142
      %p156 = scmp.eq.s32.totalorder %s24, 1
      %p157 = por %p155, %p156
      %p159 = scmp.ne.s32.totalorder %s142, %s158
      %p160 = scmp.eq.s32.totalorder %s24, 0
      %p161 = por %p159, %p160
      %p162 = scmp.le.s32.totalorder 1, %s18
      %p163 = scmp.lt.s32.totalorder %s18, 3
      %p164 = pnand %p162, %p163
      %p165 = pneg %p164
      // Predicated region
      $region9: #{tpu_custom_call.1} parent=5 // pred_check
        _
      $region10: #{tpu_custom_call.1} parent=5 // pred_check_branch
        %167 = sbr.rel (%p164) target = $region12
      $region11: #{tpu_custom_call.1} parent=5 // pred_region
        %s168 = ssub.s32 %s18, 1
        // Predicated region
        $region13: #{tpu_custom_call.1} parent=11 // pred_check
          %p169 = pneg %p65
        $region14: #{tpu_custom_call.1} parent=11 // pred_check_branch
          %171 = sbr.rel (%p169) target = $region16
        $region15: #{tpu_custom_call.1} parent=11 // pred_region
          %s173 = ssub.s32 16384, 16384
          %174 = vsyncadd [#allocation6], %s173
          %s175 = sshll.u32 [#allocation5], 4
          %s176 = int_to_ptr.vmem [resolvable:$true] %s175
          %181 = dma.hbm_to_vmem [thread:$0]  %s1, 16384, %s176, [#allocation6], 512, 512, 32
        $region16: #{tpu_custom_call.1} parent=11 // pred_fallthru
          _
        // Predicated region
        $region17: #{tpu_custom_call.1} parent=11 // pred_check
          %p182 = pneg %p86
        $region18: #{tpu_custom_call.1} parent=11 // pred_check_branch
          %184 = sbr.rel (%p182) target = $region20
        $region19: #{tpu_custom_call.1} parent=11 // pred_region
          _
        $region20: #{tpu_custom_call.1} parent=11 // pred_fallthru
          _
        // Predicated region
        $region21: #{tpu_custom_call.1} parent=11 // pred_check
          %p185 = pneg %p107
        $region22: #{tpu_custom_call.1} parent=11 // pred_check_branch
          %187 = sbr.rel (%p185) target = $region24
        $region23: #{tpu_custom_call.1} parent=11 // pred_region
          %s189 = ssub.s32 8192, 8192
          %190 = vsyncadd [#allocation6], %s189
          %s191 = sshll.u32 [#allocation7], 4
          %s192 = int_to_ptr.vmem [resolvable:$true] %s191
          %197 = dma.hbm_to_vmem [thread:$0]  %s3, 8192, %s192, [#allocation6], 128, 128, 8
        $region24: #{tpu_custom_call.1} parent=11 // pred_fallthru
          _
        // Predicated region
        $region25: #{tpu_custom_call.1} parent=11 // pred_check
          %p198 = pneg %p128
        $region26: #{tpu_custom_call.1} parent=11 // pred_check_branch
          %200 = sbr.rel (%p198) target = $region28
        $region27: #{tpu_custom_call.1} parent=11 // pred_region
          _
        $region28: #{tpu_custom_call.1} parent=11 // pred_fallthru
          _
      $region12: #{tpu_custom_call.1} parent=5 // pred_fallthru
        _
      %p201 = scmp.lt.s32.totalorder %s18, 2
      // Predicated region
      $region29: #{tpu_custom_call.1} parent=5 // pred_check
        %p202 = pneg %p201
      $region30: #{tpu_custom_call.1} parent=5 // pred_check_branch
        %204 = sbr.rel (%p202) target = $region32
      $region31: #{tpu_custom_call.1} parent=5 // pred_region
        // Predicated region
        $region33: #{tpu_custom_call.1} parent=31 // pred_check
          %p205 = pneg %p38
        $region34: #{tpu_custom_call.1} parent=31 // pred_check_branch
          %207 = sbr.rel (%p205) target = $region36
        $region35: #{tpu_custom_call.1} parent=31 // pred_region
          %s208 = sand.u32 %s28, 1
          %s209 = scalar_lea.sflag [#allocation3], %s208
          %s210 = sand.u32 %s28, 1
          %s211 = smul.addr %s210, 256
          %s212 = scalar_lea.vmem [#allocation2], %s211
          %s213 = smul.u32 16, %s18
          %s215 = ssub.s32 4096, 4096
          %216 = vsyncadd %s209, %s215
          %s217 = smul.addr %s213, 2
          %s218 = smul.addr %s217, 128
          %s219 = scalar_lea.hbm %s0, %s218
          %s220 = sshll.u32 %s212, 4
          %s221 = int_to_ptr.vmem [resolvable:$true] %s220
          %226 = dma.hbm_to_vmem [thread:$0]  %s219, 4096, %s221, %s209, 256, 256, 16
        $region36: #{tpu_custom_call.1} parent=31 // pred_fallthru
          _
      $region32: #{tpu_custom_call.1} parent=5 // pred_fallthru
        _
      %p227 = scmp.le.s32.totalorder 1, %s18
      %p228 = scmp.lt.s32.totalorder %s18, 3
      %p229 = pnand %p227, %p228
      %p230 = pneg %p229
      // Predicated region
      $region37: #{tpu_custom_call.1} parent=5 // pred_check
        _
      $region38: #{tpu_custom_call.1} parent=5 // pred_check_branch
        %232 = sbr.rel (%p229) target = $region40
      $region39: #{tpu_custom_call.1} parent=5 // pred_region
        %s233 = ssub.s32 %s18, 1
        %s234 = sand.u32 %s31, 1
        %s235 = scalar_lea.sflag [#allocation3], %s234
        %s236 = sand.u32 %s31, 1
        %s237 = smul.addr %s236, 256
        %s238 = scalar_lea.vmem [#allocation2], %s237
        // Predicated region
        $region41: #{tpu_custom_call.1} parent=39 // pred_check
          %p239 = pneg %p44
        $region42: #{tpu_custom_call.1} parent=39 // pred_check_branch
          %241 = sbr.rel (%p239) target = $region44
        $region43: #{tpu_custom_call.1} parent=39 // pred_region
          %242 = dma.done %s235, 4096
        $region44: #{tpu_custom_call.1} parent=39 // pred_fallthru
          _
        // Predicated region
        $region45: #{tpu_custom_call.1} parent=39 // pred_check
          %p243 = pneg %p65
        $region46: #{tpu_custom_call.1} parent=39 // pred_check_branch
          %245 = sbr.rel (%p243) target = $region48
        $region47: #{tpu_custom_call.1} parent=39 // pred_region
          %246 = dma.done [#allocation6], 16384
        $region48: #{tpu_custom_call.1} parent=39 // pred_fallthru
          _
        // Predicated region
        $region49: #{tpu_custom_call.1} parent=39 // pred_check
          %p247 = pneg %p107
        $region50: #{tpu_custom_call.1} parent=39 // pred_check_branch
          %249 = sbr.rel (%p247) target = $region52
        $region51: #{tpu_custom_call.1} parent=39 // pred_region
          %250 = dma.done [#allocation6], 8192
        $region52: #{tpu_custom_call.1} parent=39 // pred_fallthru
          _
        %s251 = sand.u32 %s31, 1
        %s252 = scalar_lea.sflag [#allocation3], %s251
        %s253 = sand.u32 %s31, 1
        %s254 = smul.addr %s253, 256
        %s255 = scalar_lea.vmem [#allocation2], %s254
        %p256 = pneg %p44
        %p257 = pneg %p41
        %p258 = pneg %p65
        %p259 = pneg %p62
        %p260 = pneg %p86
        %p261 = pneg %p83
        %p262 = pneg %p107
        %p263 = pneg %p104
        %p264 = pneg %p128
        %p265 = pneg %p125
        %p266 = pneg %p154
        %p267 = pneg %p151
        %s268 = sand.u32 %s141, 1
        %s269 = scalar_lea.sflag [#allocation4], %s268
        %s270 = sand.u32 %s141, 1
        %s271 = smul.addr %s270, 128
        %s272 = scalar_lea.vmem [#allocation8], %s271
        %s273 = smul.u32 16, %s23
        %s274 = smul.u32 16, %s23
        %s275 = smul.u32 0, 2
        %s276 = smul.addr %s275, 8
        %s277 = scalar_lea.vmem %s238, %s276 [#allocation2]
        %v278 = vld [vmem:[%s277] sm:$0xff]
        %v279 = vld [vmem:[%s277 + $0x8] sm:$0xff]
        %v280 = vld [vmem:[%s277 + $0x10] sm:$0xff]
        %v281 = vld [vmem:[%s277 + $0x18] sm:$0xff]
        %v282 = vld [vmem:[%s277 + $0x20] sm:$0xff]
        %v283 = vld [vmem:[%s277 + $0x28] sm:$0xff]
        %v284 = vld [vmem:[%s277 + $0x30] sm:$0xff]
        %v285 = vld [vmem:[%s277 + $0x38] sm:$0xff]
        %v286 = vld [vmem:[%s277 + $0x40] sm:$0xff]
        %v287 = vld [vmem:[%s277 + $0x48] sm:$0xff]
        %v288 = vld [vmem:[%s277 + $0x50] sm:$0xff]
        %v289 = vld [vmem:[%s277 + $0x58] sm:$0xff]
        %v290 = vld [vmem:[%s277 + $0x60] sm:$0xff]
        %v291 = vld [vmem:[%s277 + $0x68] sm:$0xff]
        %v292 = vld [vmem:[%s277 + $0x70] sm:$0xff]
        %v293 = vld [vmem:[%s277 + $0x78] sm:$0xff]
        %v294 = vld [vmem:[%s277 + $0x80] sm:$0xff]
        %v295 = vld [vmem:[%s277 + $0x88] sm:$0xff]
        %v296 = vld [vmem:[%s277 + $0x90] sm:$0xff]
        %v297 = vld [vmem:[%s277 + $0x98] sm:$0xff]
        %v298 = vld [vmem:[%s277 + $0xa0] sm:$0xff]
        %v299 = vld [vmem:[%s277 + $0xa8] sm:$0xff]
        %v300 = vld [vmem:[%s277 + $0xb0] sm:$0xff]
        %v301 = vld [vmem:[%s277 + $0xb8] sm:$0xff]
        %v302 = vld [vmem:[%s277 + $0xc0] sm:$0xff]
        %v303 = vld [vmem:[%s277 + $0xc8] sm:$0xff]
        %v304 = vld [vmem:[%s277 + $0xd0] sm:$0xff]
        %v305 = vld [vmem:[%s277 + $0xd8] sm:$0xff]
        %v306 = vld [vmem:[%s277 + $0xe0] sm:$0xff]
        %v307 = vld [vmem:[%s277 + $0xe8] sm:$0xff]
        %v308 = vld [vmem:[%s277 + $0xf0] sm:$0xff]
        %v309 = vld [vmem:[%s277 + $0xf8] sm:$0xff]
        %v310 = vld [vmem:[#allocation5] sm:$0xff]
        %v311 = vld [vmem:[#allocation5 + $0x8] sm:$0xff]
        %v312 = vld [vmem:[#allocation5 + $0x10] sm:$0xff]
        %v313 = vld [vmem:[#allocation5 + $0x18] sm:$0xff]
        %v314 = vld [vmem:[#allocation5 + $0x20] sm:$0xff]
        %v315 = vld [vmem:[#allocation5 + $0x28] sm:$0xff]
        %v316 = vld [vmem:[#allocation5 + $0x30] sm:$0xff]
        %v317 = vld [vmem:[#allocation5 + $0x38] sm:$0xff]
        %v318 = vld [vmem:[#allocation5 + $0x40] sm:$0xff]
        %v319 = vld [vmem:[#allocation5 + $0x48] sm:$0xff]
        %v320 = vld [vmem:[#allocation5 + $0x50] sm:$0xff]
        %v321 = vld [vmem:[#allocation5 + $0x58] sm:$0xff]
        %v322 = vld [vmem:[#allocation5 + $0x60] sm:$0xff]
        %v323 = vld [vmem:[#allocation5 + $0x68] sm:$0xff]
        %v324 = vld [vmem:[#allocation5 + $0x70] sm:$0xff]
        %v325 = vld [vmem:[#allocation5 + $0x78] sm:$0xff]
        %v326 = vld [vmem:[#allocation5 + $0x80] sm:$0xff]
        %v327 = vld [vmem:[#allocation5 + $0x88] sm:$0xff]
        %v328 = vld [vmem:[#allocation5 + $0x90] sm:$0xff]
        %v329 = vld [vmem:[#allocation5 + $0x98] sm:$0xff]
        %v330 = vld [vmem:[#allocation5 + $0xa0] sm:$0xff]
        %v331 = vld [vmem:[#allocation5 + $0xa8] sm:$0xff]
        %v332 = vld [vmem:[#allocation5 + $0xb0] sm:$0xff]
        %v333 = vld [vmem:[#allocation5 + $0xb8] sm:$0xff]
        %v334 = vld [vmem:[#allocation5 + $0xc0] sm:$0xff]
        %v335 = vld [vmem:[#allocation5 + $0xc8] sm:$0xff]
        %v336 = vld [vmem:[#allocation5 + $0xd0] sm:$0xff]
        %v337 = vld [vmem:[#allocation5 + $0xd8] sm:$0xff]
        %v338 = vld [vmem:[#allocation5 + $0xe0] sm:$0xff]
        %v339 = vld [vmem:[#allocation5 + $0xe8] sm:$0xff]
        %v340 = vld [vmem:[#allocation5 + $0xf0] sm:$0xff]
        %v341 = vld [vmem:[#allocation5 + $0xf8] sm:$0xff]
        %v342 = vld [vmem:[#allocation5 + $0x100] sm:$0xff]
        %v343 = vld [vmem:[#allocation5 + $0x108] sm:$0xff]
        %v344 = vld [vmem:[#allocation5 + $0x110] sm:$0xff]
        %v345 = vld [vmem:[#allocation5 + $0x118] sm:$0xff]
        %v346 = vld [vmem:[#allocation5 + $0x120] sm:$0xff]
        %v347 = vld [vmem:[#allocation5 + $0x128] sm:$0xff]
        %v348 = vld [vmem:[#allocation5 + $0x130] sm:$0xff]
        %v349 = vld [vmem:[#allocation5 + $0x138] sm:$0xff]
        %v350 = vld [vmem:[#allocation5 + $0x140] sm:$0xff]
        %v351 = vld [vmem:[#allocation5 + $0x148] sm:$0xff]
        %v352 = vld [vmem:[#allocation5 + $0x150] sm:$0xff]
        %v353 = vld [vmem:[#allocation5 + $0x158] sm:$0xff]
        %v354 = vld [vmem:[#allocation5 + $0x160] sm:$0xff]
        %v355 = vld [vmem:[#allocation5 + $0x168] sm:$0xff]
        %v356 = vld [vmem:[#allocation5 + $0x170] sm:$0xff]
        %v357 = vld [vmem:[#allocation5 + $0x178] sm:$0xff]
        %v358 = vld [vmem:[#allocation5 + $0x180] sm:$0xff]
        %v359 = vld [vmem:[#allocation5 + $0x188] sm:$0xff]
        %v360 = vld [vmem:[#allocation5 + $0x190] sm:$0xff]
        %v361 = vld [vmem:[#allocation5 + $0x198] sm:$0xff]
        %v362 = vld [vmem:[#allocation5 + $0x1a0] sm:$0xff]
        %v363 = vld [vmem:[#allocation5 + $0x1a8] sm:$0xff]
        %v364 = vld [vmem:[#allocation5 + $0x1b0] sm:$0xff]
        %v365 = vld [vmem:[#allocation5 + $0x1b8] sm:$0xff]
        %v366 = vld [vmem:[#allocation5 + $0x1c0] sm:$0xff]
        %v367 = vld [vmem:[#allocation5 + $0x1c8] sm:$0xff]
        %v368 = vld [vmem:[#allocation5 + $0x1d0] sm:$0xff]
        %v369 = vld [vmem:[#allocation5 + $0x1d8] sm:$0xff]
        %v370 = vld [vmem:[#allocation5 + $0x1e0] sm:$0xff]
        %v371 = vld [vmem:[#allocation5 + $0x1e8] sm:$0xff]
        %v372 = vld [vmem:[#allocation5 + $0x1f0] sm:$0xff]
        %v373 = vld [vmem:[#allocation5 + $0x1f8] sm:$0xff]
        %v374 = vld [vmem:[#allocation5 + $0x200] sm:$0xff]
        %v375 = vld [vmem:[#allocation5 + $0x208] sm:$0xff]
        %v376 = vld [vmem:[#allocation5 + $0x210] sm:$0xff]
        %v377 = vld [vmem:[#allocation5 + $0x218] sm:$0xff]
        %v378 = vld [vmem:[#allocation5 + $0x220] sm:$0xff]
        %v379 = vld [vmem:[#allocation5 + $0x228] sm:$0xff]
        %v380 = vld [vmem:[#allocation5 + $0x230] sm:$0xff]
        %v381 = vld [vmem:[#allocation5 + $0x238] sm:$0xff]
        %v382 = vld [vmem:[#allocation5 + $0x240] sm:$0xff]
        %v383 = vld [vmem:[#allocation5 + $0x248] sm:$0xff]
        %v384 = vld [vmem:[#allocation5 + $0x250] sm:$0xff]
        %v385 = vld [vmem:[#allocation5 + $0x258] sm:$0xff]
        %v386 = vld [vmem:[#allocation5 + $0x260] sm:$0xff]
        %v387 = vld [vmem:[#allocation5 + $0x268] sm:$0xff]
        %v388 = vld [vmem:[#allocation5 + $0x270] sm:$0xff]
        %v389 = vld [vmem:[#allocation5 + $0x278] sm:$0xff]
        %v390 = vld [vmem:[#allocation5 + $0x280] sm:$0xff]
        %v391 = vld [vmem:[#allocation5 + $0x288] sm:$0xff]
        %v392 = vld [vmem:[#allocation5 + $0x290] sm:$0xff]
        %v393 = vld [vmem:[#allocation5 + $0x298] sm:$0xff]
        %v394 = vld [vmem:[#allocation5 + $0x2a0] sm:$0xff]
        %v395 = vld [vmem:[#allocation5 + $0x2a8] sm:$0xff]
        %v396 = vld [vmem:[#allocation5 + $0x2b0] sm:$0xff]
        %v397 = vld [vmem:[#allocation5 + $0x2b8] sm:$0xff]
        %v398 = vld [vmem:[#allocation5 + $0x2c0] sm:$0xff]
        %v399 = vld [vmem:[#allocation5 + $0x2c8] sm:$0xff]
        %v400 = vld [vmem:[#allocation5 + $0x2d0] sm:$0xff]
        %v401 = vld [vmem:[#allocation5 + $0x2d8] sm:$0xff]
        %v402 = vld [vmem:[#allocation5 + $0x2e0] sm:$0xff]
        %v403 = vld [vmem:[#allocation5 + $0x2e8] sm:$0xff]
        %v404 = vld [vmem:[#allocation5 + $0x2f0] sm:$0xff]
        %v405 = vld [vmem:[#allocation5 + $0x2f8] sm:$0xff]
        %v406 = vld [vmem:[#allocation5 + $0x300] sm:$0xff]
        %v407 = vld [vmem:[#allocation5 + $0x308] sm:$0xff]
        %v408 = vld [vmem:[#allocation5 + $0x310] sm:$0xff]
        %v409 = vld [vmem:[#allocation5 + $0x318] sm:$0xff]
        %v410 = vld [vmem:[#allocation5 + $0x320] sm:$0xff]
        %v411 = vld [vmem:[#allocation5 + $0x328] sm:$0xff]
        %v412 = vld [vmem:[#allocation5 + $0x330] sm:$0xff]
        %v413 = vld [vmem:[#allocation5 + $0x338] sm:$0xff]
        %v414 = vld [vmem:[#allocation5 + $0x340] sm:$0xff]
        %v415 = vld [vmem:[#allocation5 + $0x348] sm:$0xff]
        %v416 = vld [vmem:[#allocation5 + $0x350] sm:$0xff]
        %v417 = vld [vmem:[#allocation5 + $0x358] sm:$0xff]
        %v418 = vld [vmem:[#allocation5 + $0x360] sm:$0xff]
        %v419 = vld [vmem:[#allocation5 + $0x368] sm:$0xff]
        %v420 = vld [vmem:[#allocation5 + $0x370] sm:$0xff]
        %v421 = vld [vmem:[#allocation5 + $0x378] sm:$0xff]
        %v422 = vld [vmem:[#allocation5 + $0x380] sm:$0xff]
        %v423 = vld [vmem:[#allocation5 + $0x388] sm:$0xff]
        %v424 = vld [vmem:[#allocation5 + $0x390] sm:$0xff]
        %v425 = vld [vmem:[#allocation5 + $0x398] sm:$0xff]
        %v426 = vld [vmem:[#allocation5 + $0x3a0] sm:$0xff]
        %v427 = vld [vmem:[#allocation5 + $0x3a8] sm:$0xff]
        %v428 = vld [vmem:[#allocation5 + $0x3b0] sm:$0xff]
        %v429 = vld [vmem:[#allocation5 + $0x3b8] sm:$0xff]
        %v430 = vld [vmem:[#allocation5 + $0x3c0] sm:$0xff]
        %v431 = vld [vmem:[#allocation5 + $0x3c8] sm:$0xff]
        %v432 = vld [vmem:[#allocation5 + $0x3d0] sm:$0xff]
        %v433 = vld [vmem:[#allocation5 + $0x3d8] sm:$0xff]
        %v434 = vld [vmem:[#allocation5 + $0x3e0] sm:$0xff]
        %v435 = vld [vmem:[#allocation5 + $0x3e8] sm:$0xff]
        %v436 = vld [vmem:[#allocation5 + $0x3f0] sm:$0xff]
        %v437 = vld [vmem:[#allocation5 + $0x3f8] sm:$0xff]
        %v438 = vld [vmem:[%s2] sm:$0xf]
        %v440 = vlaneseq
        %v441 = vshrl.u32 %v440, 7
        %v442 = vsub.s32 0, %v441
        %v443 = vrot.slane %v438, %v442
        %v444 = vlaneseq
        %v445 = vshrl.u32 %v444, 7
        %v446 = vsub.s32 1, %v445
        %v447 = vrot.slane %v438, %v446
        %v448 = vlaneseq
        %v449 = vshrl.u32 %v448, 7
        %v450 = vsub.s32 2, %v449
        %v451 = vrot.slane %v438, %v450
        %v452 = vlaneseq
        %v453 = vshrl.u32 %v452, 7
        %v454 = vsub.s32 3, %v453
        %v455 = vrot.slane %v438, %v454
        %460 = vmatprep.subr.mxu0 %v311
        %461 = vmatpush1.msra.mxu0 %v310
        %462 = vmatprep.subr.mxu0 %v315
        %463 = vmatpush1.msra.mxu0 %v314
        %464 = vmatprep.subr.mxu0 %v319
        %465 = vmatpush1.msra.mxu0 %v318
        %466 = vmatprep.subr.mxu0 %v323
        %467 = vmatpush1.msra.mxu0 %v322
        %468 = vmatprep.subr.mxu0 %v327
        %469 = vmatpush1.msra.mxu0 %v326
        %470 = vmatprep.subr.mxu0 %v331
        %471 = vmatpush1.msra.mxu0 %v330
        %472 = vmatprep.subr.mxu0 %v335
        %473 = vmatpush1.msra.mxu0 %v334
        %474 = vmatprep.subr.mxu0 %v339
        %475 = vmatpush1.msra.mxu0 %v338
        %476 = vmatprep.subr.mxu0 %v343
        %477 = vmatpush1.msra.mxu0 %v342
        %478 = vmatprep.subr.mxu0 %v347
        %479 = vmatpush1.msra.mxu0 %v346
        %480 = vmatprep.subr.mxu0 %v351
        %481 = vmatpush1.msra.mxu0 %v350
        %482 = vmatprep.subr.mxu0 %v355
        %483 = vmatpush1.msra.mxu0 %v354
        %484 = vmatprep.subr.mxu0 %v359
        %485 = vmatpush1.msra.mxu0 %v358
        %486 = vmatprep.subr.mxu0 %v363
        %487 = vmatpush1.msra.mxu0 %v362
        %488 = vmatprep.subr.mxu0 %v367
        %489 = vmatpush1.msra.mxu0 %v366
        %490 = vmatprep.subr.mxu0 %v371
        %491 = vmatpush1.msra.mxu0 %v370
        %492 = vmatprep.subr.mxu0 %v375
        %493 = vmatpush1.msra.mxu0 %v374
        %494 = vmatprep.subr.mxu0 %v379
        %495 = vmatpush1.msra.mxu0 %v378
        %496 = vmatprep.subr.mxu0 %v383
        %497 = vmatpush1.msra.mxu0 %v382
        %498 = vmatprep.subr.mxu0 %v387
        %499 = vmatpush1.msra.mxu0 %v386
        %500 = vmatprep.subr.mxu0 %v391
        %501 = vmatpush1.msra.mxu0 %v390
        %502 = vmatprep.subr.mxu0 %v395
        %503 = vmatpush1.msra.mxu0 %v394
        %504 = vmatprep.subr.mxu0 %v399
        %505 = vmatpush1.msra.mxu0 %v398
        %506 = vmatprep.subr.mxu0 %v403
        %507 = vmatpush1.msra.mxu0 %v402
        %508 = vmatprep.subr.mxu0 %v407
        %509 = vmatpush1.msra.mxu0 %v406
        %510 = vmatprep.subr.mxu0 %v411
        %511 = vmatpush1.msra.mxu0 %v410
        %512 = vmatprep.subr.mxu0 %v415
        %513 = vmatpush1.msra.mxu0 %v414
        %514 = vmatprep.subr.mxu0 %v419
        %515 = vmatpush1.msra.mxu0 %v418
        %516 = vmatprep.subr.mxu0 %v423
        %517 = vmatpush1.msra.mxu0 %v422
        %518 = vmatprep.subr.mxu0 %v427
        %519 = vmatpush1.msra.mxu0 %v426
        %520 = vmatprep.subr.mxu0 %v431
        %521 = vmatpush1.msra.mxu0 %v430
        %522 = vmatprep.subr.mxu0 %v435
        %523 = vmatpush1.msra.mxu0 %v434
        %524 = vmatprep.mubr.f32.mxu0 %v279
        %525 = vmatmul.mubr.f32.gmra.mrb[0].mxu0 %v278
        %v526 = vpop.f32.mrb[0].mxu0
        %v527 = vadd.f32 %v443, %v526
        %v528 = vpop.f32.mrb[0].mxu0
        %v529 = vadd.f32 %v447, %v528
        %530 = vmatprep.mubr.f32.mxu0 %v281
        %531 = vmatmul.mubr.f32.gmra.mrb[0].mxu0 %v280
        %v532 = vpop.f32.mrb[0].mxu0
        %v533 = vadd.f32 %v443, %v532
        %v534 = vpop.f32.mrb[0].mxu0
        %v535 = vadd.f32 %v447, %v534
        %536 = vmatprep.mubr.f32.mxu0 %v283
        %537 = vmatmul.mubr.f32.gmra.mrb[0].mxu0 %v282
        %v538 = vpop.f32.mrb[0].mxu0
        %v539 = vadd.f32 %v443, %v538
        %v540 = vpop.f32.mrb[0].mxu0
        %v541 = vadd.f32 %v447, %v540
        %542 = vmatprep.mubr.f32.mxu0 %v285
        %543 = vmatmul.mubr.f32.gmra.mrb[0].mxu0 %v284
        %v544 = vpop.f32.mrb[0].mxu0
        %v545 = vadd.f32 %v443, %v544
        %v546 = vpop.f32.mrb[0].mxu0
        %v547 = vadd.f32 %v447, %v546
        %548 = vmatprep.mubr.f32.mxu0 %v287
        %549 = vmatmul.mubr.f32.gmra.mrb[0].mxu0 %v286
        %v550 = vpop.f32.mrb[0].mxu0
        %v551 = vadd.f32 %v443, %v550
        %v552 = vpop.f32.mrb[0].mxu0
        %v553 = vadd.f32 %v447, %v552
        %554 = vmatprep.mubr.f32.mxu0 %v289
        %555 = vmatmul.mubr.f32.gmra.mrb[0].mxu0 %v288
        %v556 = vpop.f32.mrb[0].mxu0
        %v557 = vadd.f32 %v443, %v556
        %v558 = vpop.f32.mrb[0].mxu0
        %v559 = vadd.f32 %v447, %v558
        %560 = vmatprep.mubr.f32.mxu0 %v291
        %561 = vmatmul.mubr.f32.gmra.mrb[0].mxu0 %v290
        %v562 = vpop.f32.mrb[0].mxu0
        %v563 = vadd.f32 %v443, %v562
        %v564 = vpop.f32.mrb[0].mxu0
        %v565 = vadd.f32 %v447, %v564
        %566 = vmatprep.mubr.f32.mxu0 %v293
        %567 = vmatmul.mubr.f32.gmra.mrb[0].mxu0 %v292
        %v568 = vpop.f32.mrb[0].mxu0
        %v569 = vadd.f32 %v443, %v568
        %v570 = vpop.f32.mrb[0].mxu0
        %v571 = vadd.f32 %v447, %v570
        %572 = vmatprep.mubr.f32.mxu0 %v295
        %573 = vmatmul.mubr.f32.gmra.mrb[0].mxu0 %v294
        %v574 = vpop.f32.mrb[0].mxu0
        %v575 = vadd.f32 %v443, %v574
        %v576 = vpop.f32.mrb[0].mxu0
        %v577 = vadd.f32 %v447, %v576
        %578 = vmatprep.mubr.f32.mxu0 %v297
        %579 = vmatmul.mubr.f32.gmra.mrb[0].mxu0 %v296
        %v580 = vpop.f32.mrb[0].mxu0
        %v581 = vadd.f32 %v443, %v580
        %v582 = vpop.f32.mrb[0].mxu0
        %v583 = vadd.f32 %v447, %v582
        %584 = vmatprep.mubr.f32.mxu0 %v299
        %585 = vmatmul.mubr.f32.gmra.mrb[0].mxu0 %v298
        %v586 = vpop.f32.mrb[0].mxu0
        %v587 = vadd.f32 %v443, %v586
        %v588 = vpop.f32.mrb[0].mxu0
        %v589 = vadd.f32 %v447, %v588
        %590 = vmatprep.mubr.f32.mxu0 %v301
        %591 = vmatmul.mubr.f32.gmra.mrb[0].mxu0 %v300
        %v592 = vpop.f32.mrb[0].mxu0
        %v593 = vadd.f32 %v443, %v592
        %v594 = vpop.f32.mrb[0].mxu0
        %v595 = vadd.f32 %v447, %v594
        %596 = vmatprep.mubr.f32.mxu0 %v303
        %597 = vmatmul.mubr.f32.gmra.mrb[0].mxu0 %v302
        %v598 = vpop.f32.mrb[0].mxu0
        %v599 = vadd.f32 %v443, %v598
        %v600 = vpop.f32.mrb[0].mxu0
        %v601 = vadd.f32 %v447, %v600
        %602 = vmatprep.mubr.f32.mxu0 %v305
        %603 = vmatmul.mubr.f32.gmra.mrb[0].mxu0 %v304
        %v604 = vpop.f32.mrb[0].mxu0
        %v605 = vadd.f32 %v443, %v604
        %v606 = vpop.f32.mrb[0].mxu0
        %v607 = vadd.f32 %v447, %v606
        %608 = vmatprep.mubr.f32.mxu0 %v307
        %609 = vmatmul.mubr.f32.gmra.mrb[0].mxu0 %v306
        %v610 = vpop.f32.mrb[0].mxu0
        %v611 = vadd.f32 %v443, %v610
        %v612 = vpop.f32.mrb[0].mxu0
        %v613 = vadd.f32 %v447, %v612
        %614 = vmatprep.mubr.f32.mxu0 %v309
        %615 = vmatmul.mubr.f32.gmra.mrb[0].mxu0 %v308
        %v616 = vpop.f32.mrb[0].mxu0
        %v617 = vadd.f32 %v443, %v616
        %v618 = vpop.f32.mrb[0].mxu0
        %v619 = vadd.f32 %v447, %v618
        %620 = vdwg.mxu0
        %621 = vmatprep.subr.mxu0 %v313
        %622 = vmatpush1.msra.mxu0 %v312
        %623 = vmatprep.subr.mxu0 %v317
        %624 = vmatpush1.msra.mxu0 %v316
        %625 = vmatprep.subr.mxu0 %v321
        %626 = vmatpush1.msra.mxu0 %v320
        %627 = vmatprep.subr.mxu0 %v325
        %628 = vmatpush1.msra.mxu0 %v324
        %629 = vmatprep.subr.mxu0 %v329
        %630 = vmatpush1.msra.mxu0 %v328
        %631 = vmatprep.subr.mxu0 %v333
        %632 = vmatpush1.msra.mxu0 %v332
        %633 = vmatprep.subr.mxu0 %v337
        %634 = vmatpush1.msra.mxu0 %v336
        %635 = vmatprep.subr.mxu0 %v341
        %636 = vmatpush1.msra.mxu0 %v340
        %637 = vmatprep.subr.mxu0 %v345
        %638 = vmatpush1.msra.mxu0 %v344
        %639 = vmatprep.subr.mxu0 %v349
        %640 = vmatpush1.msra.mxu0 %v348
        %641 = vmatprep.subr.mxu0 %v353
        %642 = vmatpush1.msra.mxu0 %v352
        %643 = vmatprep.subr.mxu0 %v357
        %644 = vmatpush1.msra.mxu0 %v356
        %645 = vmatprep.subr.mxu0 %v361
        %646 = vmatpush1.msra.mxu0 %v360
        %647 = vmatprep.subr.mxu0 %v365
        %648 = vmatpush1.msra.mxu0 %v364
        %649 = vmatprep.subr.mxu0 %v369
        %650 = vmatpush1.msra.mxu0 %v368
        %651 = vmatprep.subr.mxu0 %v373
        %652 = vmatpush1.msra.mxu0 %v372
        %653 = vmatprep.subr.mxu0 %v377
        %654 = vmatpush1.msra.mxu0 %v376
        %655 = vmatprep.subr.mxu0 %v381
        %656 = vmatpush1.msra.mxu0 %v380
        %657 = vmatprep.subr.mxu0 %v385
        %658 = vmatpush1.msra.mxu0 %v384
        %659 = vmatprep.subr.mxu0 %v389
        %660 = vmatpush1.msra.mxu0 %v388
        %661 = vmatprep.subr.mxu0 %v393
        %662 = vmatpush1.msra.mxu0 %v392
        %663 = vmatprep.subr.mxu0 %v397
        %664 = vmatpush1.msra.mxu0 %v396
        %665 = vmatprep.subr.mxu0 %v401
        %666 = vmatpush1.msra.mxu0 %v400
        %667 = vmatprep.subr.mxu0 %v405
        %668 = vmatpush1.msra.mxu0 %v404
        %669 = vmatprep.subr.mxu0 %v409
        %670 = vmatpush1.msra.mxu0 %v408
        %671 = vmatprep.subr.mxu0 %v413
        %672 = vmatpush1.msra.mxu0 %v412
        %673 = vmatprep.subr.mxu0 %v417
        %674 = vmatpush1.msra.mxu0 %v416
        %675 = vmatprep.subr.mxu0 %v421
        %676 = vmatpush1.msra.mxu0 %v420
        %677 = vmatprep.subr.mxu0 %v425
        %678 = vmatpush1.msra.mxu0 %v424
        %679 = vmatprep.subr.mxu0 %v429
        %680 = vmatpush1.msra.mxu0 %v428
        %681 = vmatprep.subr.mxu0 %v433
        %682 = vmatpush1.msra.mxu0 %v432
        %683 = vmatprep.subr.mxu0 %v437
        %684 = vmatpush1.msra.mxu0 %v436
        %685 = vmatprep.mubr.f32.mxu0 %v279
        %686 = vmatmul.mubr.f32.gmra.mrb[0].mxu0 %v278
        %v687 = vpop.f32.mrb[0].mxu0
        %v688 = vadd.f32 %v451, %v687
        %v689 = vpop.f32.mrb[0].mxu0
        %v690 = vadd.f32 %v455, %v689
        %691 = vmatprep.mubr.f32.mxu0 %v281
        %692 = vmatmul.mubr.f32.gmra.mrb[0].mxu0 %v280
        %v693 = vpop.f32.mrb[0].mxu0
        %v694 = vadd.f32 %v451, %v693
        %v695 = vpop.f32.mrb[0].mxu0
        %v696 = vadd.f32 %v455, %v695
        %697 = vmatprep.mubr.f32.mxu0 %v283
        %698 = vmatmul.mubr.f32.gmra.mrb[0].mxu0 %v282
        %v699 = vpop.f32.mrb[0].mxu0
        %v700 = vadd.f32 %v451, %v699
        %v701 = vpop.f32.mrb[0].mxu0
        %v702 = vadd.f32 %v455, %v701
        %703 = vmatprep.mubr.f32.mxu0 %v285
        %704 = vmatmul.mubr.f32.gmra.mrb[0].mxu0 %v284
        %v705 = vpop.f32.mrb[0].mxu0
        %v706 = vadd.f32 %v451, %v705
        %v707 = vpop.f32.mrb[0].mxu0
        %v708 = vadd.f32 %v455, %v707
        %709 = vmatprep.mubr.f32.mxu0 %v287
        %710 = vmatmul.mubr.f32.gmra.mrb[0].mxu0 %v286
        %v711 = vpop.f32.mrb[0].mxu0
        %v712 = vadd.f32 %v451, %v711
        %v713 = vpop.f32.mrb[0].mxu0
        %v714 = vadd.f32 %v455, %v713
        %715 = vmatprep.mubr.f32.mxu0 %v289
        %716 = vmatmul.mubr.f32.gmra.mrb[0].mxu0 %v288
        %v717 = vpop.f32.mrb[0].mxu0
        %v718 = vadd.f32 %v451, %v717
        %v719 = vpop.f32.mrb[0].mxu0
        %v720 = vadd.f32 %v455, %v719
        %721 = vmatprep.mubr.f32.mxu0 %v291
        %722 = vmatmul.mubr.f32.gmra.mrb[0].mxu0 %v290
        %v723 = vpop.f32.mrb[0].mxu0
        %v724 = vadd.f32 %v451, %v723
        %v725 = vpop.f32.mrb[0].mxu0
        %v726 = vadd.f32 %v455, %v725
        %727 = vmatprep.mubr.f32.mxu0 %v293
        %728 = vmatmul.mubr.f32.gmra.mrb[0].mxu0 %v292
        %v729 = vpop.f32.mrb[0].mxu0
        %v730 = vadd.f32 %v451, %v729
        %v731 = vpop.f32.mrb[0].mxu0
        %v732 = vadd.f32 %v455, %v731
        %733 = vmatprep.mubr.f32.mxu0 %v295
        %734 = vmatmul.mubr.f32.gmra.mrb[0].mxu0 %v294
        %v735 = vpop.f32.mrb[0].mxu0
        %v736 = vadd.f32 %v451, %v735
        %v737 = vpop.f32.mrb[0].mxu0
        %v738 = vadd.f32 %v455, %v737
        %739 = vmatprep.mubr.f32.mxu0 %v297
        %740 = vmatmul.mubr.f32.gmra.mrb[0].mxu0 %v296
        %v741 = vpop.f32.mrb[0].mxu0
        %v742 = vadd.f32 %v451, %v741
        %v743 = vpop.f32.mrb[0].mxu0
        %v744 = vadd.f32 %v455, %v743
        %745 = vmatprep.mubr.f32.mxu0 %v299
        %746 = vmatmul.mubr.f32.gmra.mrb[0].mxu0 %v298
        %v747 = vpop.f32.mrb[0].mxu0
        %v748 = vadd.f32 %v451, %v747
        %v749 = vpop.f32.mrb[0].mxu0
        %v750 = vadd.f32 %v455, %v749
        %751 = vmatprep.mubr.f32.mxu0 %v301
        %752 = vmatmul.mubr.f32.gmra.mrb[0].mxu0 %v300
        %v753 = vpop.f32.mrb[0].mxu0
        %v754 = vadd.f32 %v451, %v753
        %v755 = vpop.f32.mrb[0].mxu0
        %v756 = vadd.f32 %v455, %v755
        %757 = vmatprep.mubr.f32.mxu0 %v303
        %758 = vmatmul.mubr.f32.gmra.mrb[0].mxu0 %v302
        %v759 = vpop.f32.mrb[0].mxu0
        %v760 = vadd.f32 %v451, %v759
        %v761 = vpop.f32.mrb[0].mxu0
        %v762 = vadd.f32 %v455, %v761
        %763 = vmatprep.mubr.f32.mxu0 %v305
        %764 = vmatmul.mubr.f32.gmra.mrb[0].mxu0 %v304
        %v765 = vpop.f32.mrb[0].mxu0
        %v766 = vadd.f32 %v451, %v765
        %v767 = vpop.f32.mrb[0].mxu0
        %v768 = vadd.f32 %v455, %v767
        %769 = vmatprep.mubr.f32.mxu0 %v307
        %770 = vmatmul.mubr.f32.gmra.mrb[0].mxu0 %v306
        %v771 = vpop.f32.mrb[0].mxu0
        %v772 = vadd.f32 %v451, %v771
        %v773 = vpop.f32.mrb[0].mxu0
        %v774 = vadd.f32 %v455, %v773
        %775 = vmatprep.mubr.f32.mxu0 %v309
        %776 = vmatmul.mubr.f32.gmra.mrb[0].mxu0 %v308
        %v777 = vpop.f32.mrb[0].mxu0
        %v778 = vadd.f32 %v451, %v777
        %v779 = vpop.f32.mrb[0].mxu0
        %v780 = vadd.f32 %v455, %v779
        %781 = vdwg.mxu0
        %v782 = vmax.f32 %v527, 0.0
        %v783 = vmax.f32 %v529, 0.0
        %v784 = vmax.f32 %v688, 0.0
        %v785 = vmax.f32 %v690, 0.0
        %v786 = vmax.f32 %v533, 0.0
        %v787 = vmax.f32 %v535, 0.0
        %v788 = vmax.f32 %v694, 0.0
        %v789 = vmax.f32 %v696, 0.0
        %v790 = vmax.f32 %v539, 0.0
        %v791 = vmax.f32 %v541, 0.0
        %v792 = vmax.f32 %v700, 0.0
        %v793 = vmax.f32 %v702, 0.0
        %v794 = vmax.f32 %v545, 0.0
        %v795 = vmax.f32 %v547, 0.0
        %v796 = vmax.f32 %v706, 0.0
        %v797 = vmax.f32 %v708, 0.0
        %v798 = vmax.f32 %v551, 0.0
        %v799 = vmax.f32 %v553, 0.0
        %v800 = vmax.f32 %v712, 0.0
        %v801 = vmax.f32 %v714, 0.0
        %v802 = vmax.f32 %v557, 0.0
        %v803 = vmax.f32 %v559, 0.0
        %v804 = vmax.f32 %v718, 0.0
        %v805 = vmax.f32 %v720, 0.0
        %v806 = vmax.f32 %v563, 0.0
        %v807 = vmax.f32 %v565, 0.0
        %v808 = vmax.f32 %v724, 0.0
        %v809 = vmax.f32 %v726, 0.0
        %v810 = vmax.f32 %v569, 0.0
        %v811 = vmax.f32 %v571, 0.0
        %v812 = vmax.f32 %v730, 0.0
        %v813 = vmax.f32 %v732, 0.0
        %v814 = vmax.f32 %v575, 0.0
        %v815 = vmax.f32 %v577, 0.0
        %v816 = vmax.f32 %v736, 0.0
        %v817 = vmax.f32 %v738, 0.0
        %v818 = vmax.f32 %v581, 0.0
        %v819 = vmax.f32 %v583, 0.0
        %v820 = vmax.f32 %v742, 0.0
        %v821 = vmax.f32 %v744, 0.0
        %v822 = vmax.f32 %v587, 0.0
        %v823 = vmax.f32 %v589, 0.0
        %v824 = vmax.f32 %v748, 0.0
        %v825 = vmax.f32 %v750, 0.0
        %v826 = vmax.f32 %v593, 0.0
        %v827 = vmax.f32 %v595, 0.0
        %v828 = vmax.f32 %v754, 0.0
        %v829 = vmax.f32 %v756, 0.0
        %v830 = vmax.f32 %v599, 0.0
        %v831 = vmax.f32 %v601, 0.0
        %v832 = vmax.f32 %v760, 0.0
        %v833 = vmax.f32 %v762, 0.0
        %v834 = vmax.f32 %v605, 0.0
        %v835 = vmax.f32 %v607, 0.0
        %v836 = vmax.f32 %v766, 0.0
        %v837 = vmax.f32 %v768, 0.0
        %v838 = vmax.f32 %v611, 0.0
        %v839 = vmax.f32 %v613, 0.0
        %v840 = vmax.f32 %v772, 0.0
        %v841 = vmax.f32 %v774, 0.0
        %v842 = vmax.f32 %v617, 0.0
        %v843 = vmax.f32 %v619, 0.0
        %v844 = vmax.f32 %v778, 0.0
        %v845 = vmax.f32 %v780, 0.0
        %v846 = vld [vmem:[#allocation7] sm:$0xff]
        %v847 = vld [vmem:[#allocation7 + $0x8] sm:$0xff]
        %v848 = vld [vmem:[#allocation7 + $0x10] sm:$0xff]
        %v849 = vld [vmem:[#allocation7 + $0x18] sm:$0xff]
        %v850 = vld [vmem:[#allocation7 + $0x20] sm:$0xff]
        %v851 = vld [vmem:[#allocation7 + $0x28] sm:$0xff]
        %v852 = vld [vmem:[#allocation7 + $0x30] sm:$0xff]
        %v853 = vld [vmem:[#allocation7 + $0x38] sm:$0xff]
        %v854 = vld [vmem:[#allocation7 + $0x40] sm:$0xff]
        %v855 = vld [vmem:[#allocation7 + $0x48] sm:$0xff]
        %v856 = vld [vmem:[#allocation7 + $0x50] sm:$0xff]
        %v857 = vld [vmem:[#allocation7 + $0x58] sm:$0xff]
        %v858 = vld [vmem:[#allocation7 + $0x60] sm:$0xff]
        %v859 = vld [vmem:[#allocation7 + $0x68] sm:$0xff]
        %v860 = vld [vmem:[#allocation7 + $0x70] sm:$0xff]
        %v861 = vld [vmem:[#allocation7 + $0x78] sm:$0xff]
        %v862 = vld [vmem:[#allocation7 + $0x80] sm:$0xff]
        %v863 = vld [vmem:[#allocation7 + $0x88] sm:$0xff]
        %v864 = vld [vmem:[#allocation7 + $0x90] sm:$0xff]
        %v865 = vld [vmem:[#allocation7 + $0x98] sm:$0xff]
        %v866 = vld [vmem:[#allocation7 + $0xa0] sm:$0xff]
        %v867 = vld [vmem:[#allocation7 + $0xa8] sm:$0xff]
        %v868 = vld [vmem:[#allocation7 + $0xb0] sm:$0xff]
        %v869 = vld [vmem:[#allocation7 + $0xb8] sm:$0xff]
        %v870 = vld [vmem:[#allocation7 + $0xc0] sm:$0xff]
        %v871 = vld [vmem:[#allocation7 + $0xc8] sm:$0xff]
        %v872 = vld [vmem:[#allocation7 + $0xd0] sm:$0xff]
        %v873 = vld [vmem:[#allocation7 + $0xd8] sm:$0xff]
        %v874 = vld [vmem:[#allocation7 + $0xe0] sm:$0xff]
        %v875 = vld [vmem:[#allocation7 + $0xe8] sm:$0xff]
        %v876 = vld [vmem:[#allocation7 + $0xf0] sm:$0xff]
        %v877 = vld [vmem:[#allocation7 + $0xf8] sm:$0xff]
        %v878 = vld [vmem:[#allocation7 + $0x100] sm:$0xff]
        %v879 = vld [vmem:[#allocation7 + $0x108] sm:$0xff]
        %v880 = vld [vmem:[#allocation7 + $0x110] sm:$0xff]
        %v881 = vld [vmem:[#allocation7 + $0x118] sm:$0xff]
        %v882 = vld [vmem:[#allocation7 + $0x120] sm:$0xff]
        %v883 = vld [vmem:[#allocation7 + $0x128] sm:$0xff]
        %v884 = vld [vmem:[#allocation7 + $0x130] sm:$0xff]
        %v885 = vld [vmem:[#allocation7 + $0x138] sm:$0xff]
        %v886 = vld [vmem:[#allocation7 + $0x140] sm:$0xff]
        %v887 = vld [vmem:[#allocation7 + $0x148] sm:$0xff]
        %v888 = vld [vmem:[#allocation7 + $0x150] sm:$0xff]
        %v889 = vld [vmem:[#allocation7 + $0x158] sm:$0xff]
        %v890 = vld [vmem:[#allocation7 + $0x160] sm:$0xff]
        %v891 = vld [vmem:[#allocation7 + $0x168] sm:$0xff]
        %v892 = vld [vmem:[#allocation7 + $0x170] sm:$0xff]
        %v893 = vld [vmem:[#allocation7 + $0x178] sm:$0xff]
        %v894 = vld [vmem:[#allocation7 + $0x180] sm:$0xff]
        %v895 = vld [vmem:[#allocation7 + $0x188] sm:$0xff]
        %v896 = vld [vmem:[#allocation7 + $0x190] sm:$0xff]
        %v897 = vld [vmem:[#allocation7 + $0x198] sm:$0xff]
        %v898 = vld [vmem:[#allocation7 + $0x1a0] sm:$0xff]
        %v899 = vld [vmem:[#allocation7 + $0x1a8] sm:$0xff]
        %v900 = vld [vmem:[#allocation7 + $0x1b0] sm:$0xff]
        %v901 = vld [vmem:[#allocation7 + $0x1b8] sm:$0xff]
        %v902 = vld [vmem:[#allocation7 + $0x1c0] sm:$0xff]
        %v903 = vld [vmem:[#allocation7 + $0x1c8] sm:$0xff]
        %v904 = vld [vmem:[#allocation7 + $0x1d0] sm:$0xff]
        %v905 = vld [vmem:[#allocation7 + $0x1d8] sm:$0xff]
        %v906 = vld [vmem:[#allocation7 + $0x1e0] sm:$0xff]
        %v907 = vld [vmem:[#allocation7 + $0x1e8] sm:$0xff]
        %v908 = vld [vmem:[#allocation7 + $0x1f0] sm:$0xff]
        %v909 = vld [vmem:[#allocation7 + $0x1f8] sm:$0xff]
        %v910 = vld [vmem:[%s4] sm:$0x1]
        %v912 = vlaneseq
        %v913 = vshrl.u32 %v912, 7
        %v914 = vsub.s32 0, %v913
        %v915 = vrot.slane %v910, %v914
        %917 = vmatprep.subr.mxu0 0.0
        %918 = vmatpush1.msra.mxu0 %v846
        %919 = vmatprep.subr.mxu0 0.0
        %920 = vmatpush1.msra.mxu0 %v847
        %921 = vmatprep.subr.mxu0 0.0
        %922 = vmatpush1.msra.mxu0 %v848
        %923 = vmatprep.subr.mxu0 0.0
        %924 = vmatpush1.msra.mxu0 %v849
        %925 = vmatprep.subr.mxu0 0.0
        %926 = vmatpush1.msra.mxu0 %v850
        %927 = vmatprep.subr.mxu0 0.0
        %928 = vmatpush1.msra.mxu0 %v851
        %929 = vmatprep.subr.mxu0 0.0
        %930 = vmatpush1.msra.mxu0 %v852
        %931 = vmatprep.subr.mxu0 0.0
        %932 = vmatpush1.msra.mxu0 %v853
        %933 = vmatprep.subr.mxu0 0.0
        %934 = vmatpush1.msra.mxu0 %v854
        %935 = vmatprep.subr.mxu0 0.0
        %936 = vmatpush1.msra.mxu0 %v855
        %937 = vmatprep.subr.mxu0 0.0
        %938 = vmatpush1.msra.mxu0 %v856
        %939 = vmatprep.subr.mxu0 0.0
        %940 = vmatpush1.msra.mxu0 %v857
        %941 = vmatprep.subr.mxu0 0.0
        %942 = vmatpush1.msra.mxu0 %v858
        %943 = vmatprep.subr.mxu0 0.0
        %944 = vmatpush1.msra.mxu0 %v859
        %945 = vmatprep.subr.mxu0 0.0
        %946 = vmatpush1.msra.mxu0 %v860
        %947 = vmatprep.subr.mxu0 0.0
        %948 = vmatpush1.msra.mxu0 %v861
        %949 = vmatprep.subr.mxu0 0.0
        %950 = vmatpush1.msra.mxu0 %v862
        %951 = vmatprep.subr.mxu0 0.0
        %952 = vmatpush1.msra.mxu0 %v863
        %953 = vmatprep.subr.mxu0 0.0
        %954 = vmatpush1.msra.mxu0 %v864
        %955 = vmatprep.subr.mxu0 0.0
        %956 = vmatpush1.msra.mxu0 %v865
        %957 = vmatprep.subr.mxu0 0.0
        %958 = vmatpush1.msra.mxu0 %v866
        %959 = vmatprep.subr.mxu0 0.0
        %960 = vmatpush1.msra.mxu0 %v867
        %961 = vmatprep.subr.mxu0 0.0
        %962 = vmatpush1.msra.mxu0 %v868
        %963 = vmatprep.subr.mxu0 0.0
        %964 = vmatpush1.msra.mxu0 %v869
        %965 = vmatprep.subr.mxu0 0.0
        %966 = vmatpush1.msra.mxu0 %v870
        %967 = vmatprep.subr.mxu0 0.0
        %968 = vmatpush1.msra.mxu0 %v871
        %969 = vmatprep.subr.mxu0 0.0
        %970 = vmatpush1.msra.mxu0 %v872
        %971 = vmatprep.subr.mxu0 0.0
        %972 = vmatpush1.msra.mxu0 %v873
        %973 = vmatprep.subr.mxu0 0.0
        %974 = vmatpush1.msra.mxu0 %v874
        %975 = vmatprep.subr.mxu0 0.0
        %976 = vmatpush1.msra.mxu0 %v875
        %977 = vmatprep.subr.mxu0 0.0
        %978 = vmatpush1.msra.mxu0 %v876
        %979 = vmatprep.subr.mxu0 0.0
        %980 = vmatpush1.msra.mxu0 %v877
        %981 = vmatprep.mubr.f32.mxu0 %v783
        %982 = vmatmul.mubr.f32.gmra.mrb[0].mxu0 %v782
        %v983 = vpop.f32.mrb[0].mxu0
        %v984 = vadd.f32 %v915, %v983
        %v985 = vpop.f32.mrb[0].mxu0
        %986 = vmatprep.mubr.f32.mxu0 %v787
        %987 = vmatmul.mubr.f32.gmra.mrb[0].mxu0 %v786
        %v988 = vpop.f32.mrb[0].mxu0
        %v989 = vadd.f32 %v915, %v988
        %v990 = vpop.f32.mrb[0].mxu0
        %991 = vmatprep.mubr.f32.mxu0 %v791
        %992 = vmatmul.mubr.f32.gmra.mrb[0].mxu0 %v790
        %v993 = vpop.f32.mrb[0].mxu0
        %v994 = vadd.f32 %v915, %v993
        %v995 = vpop.f32.mrb[0].mxu0
        %996 = vmatprep.mubr.f32.mxu0 %v795
        %997 = vmatmul.mubr.f32.gmra.mrb[0].mxu0 %v794
        %v998 = vpop.f32.mrb[0].mxu0
        %v999 = vadd.f32 %v915, %v998
        %v1000 = vpop.f32.mrb[0].mxu0
        %1001 = vmatprep.mubr.f32.mxu0 %v799
        %1002 = vmatmul.mubr.f32.gmra.mrb[0].mxu0 %v798
        %v1003 = vpop.f32.mrb[0].mxu0
        %v1004 = vadd.f32 %v915, %v1003
        %v1005 = vpop.f32.mrb[0].mxu0
        %1006 = vmatprep.mubr.f32.mxu0 %v803
        %1007 = vmatmul.mubr.f32.gmra.mrb[0].mxu0 %v802
        %v1008 = vpop.f32.mrb[0].mxu0
        %v1009 = vadd.f32 %v915, %v1008
        %v1010 = vpop.f32.mrb[0].mxu0
        %1011 = vmatprep.mubr.f32.mxu0 %v807
        %1012 = vmatmul.mubr.f32.gmra.mrb[0].mxu0 %v806
        %v1013 = vpop.f32.mrb[0].mxu0
        %v1014 = vadd.f32 %v915, %v1013
        %v1015 = vpop.f32.mrb[0].mxu0
        %1016 = vmatprep.mubr.f32.mxu0 %v811
        %1017 = vmatmul.mubr.f32.gmra.mrb[0].mxu0 %v810
        %v1018 = vpop.f32.mrb[0].mxu0
        %v1019 = vadd.f32 %v915, %v1018
        %v1020 = vpop.f32.mrb[0].mxu0
        %1021 = vmatprep.mubr.f32.mxu0 %v815
        %1022 = vmatmul.mubr.f32.gmra.mrb[0].mxu0 %v814
        %v1023 = vpop.f32.mrb[0].mxu0
        %v1024 = vadd.f32 %v915, %v1023
        %v1025 = vpop.f32.mrb[0].mxu0
        %1026 = vmatprep.mubr.f32.mxu0 %v819
        %1027 = vmatmul.mubr.f32.gmra.mrb[0].mxu0 %v818
        %v1028 = vpop.f32.mrb[0].mxu0
        %v1029 = vadd.f32 %v915, %v1028
        %v1030 = vpop.f32.mrb[0].mxu0
        %1031 = vmatprep.mubr.f32.mxu0 %v823
        %1032 = vmatmul.mubr.f32.gmra.mrb[0].mxu0 %v822
        %v1033 = vpop.f32.mrb[0].mxu0
        %v1034 = vadd.f32 %v915, %v1033
        %v1035 = vpop.f32.mrb[0].mxu0
        %1036 = vmatprep.mubr.f32.mxu0 %v827
        %1037 = vmatmul.mubr.f32.gmra.mrb[0].mxu0 %v826
        %v1038 = vpop.f32.mrb[0].mxu0
        %v1039 = vadd.f32 %v915, %v1038
        %v1040 = vpop.f32.mrb[0].mxu0
        %1041 = vmatprep.mubr.f32.mxu0 %v831
        %1042 = vmatmul.mubr.f32.gmra.mrb[0].mxu0 %v830
        %v1043 = vpop.f32.mrb[0].mxu0
        %v1044 = vadd.f32 %v915, %v1043
        %v1045 = vpop.f32.mrb[0].mxu0
        %1046 = vmatprep.mubr.f32.mxu0 %v835
        %1047 = vmatmul.mubr.f32.gmra.mrb[0].mxu0 %v834
        %v1048 = vpop.f32.mrb[0].mxu0
        %v1049 = vadd.f32 %v915, %v1048
        %v1050 = vpop.f32.mrb[0].mxu0
        %1051 = vmatprep.mubr.f32.mxu0 %v839
        %1052 = vmatmul.mubr.f32.gmra.mrb[0].mxu0 %v838
        %v1053 = vpop.f32.mrb[0].mxu0
        %v1054 = vadd.f32 %v915, %v1053
        %v1055 = vpop.f32.mrb[0].mxu0
        %1056 = vmatprep.mubr.f32.mxu0 %v843
        %1057 = vmatmul.mubr.f32.gmra.mrb[0].mxu0 %v842
        %v1058 = vpop.f32.mrb[0].mxu0
        %v1059 = vadd.f32 %v915, %v1058
        %v1060 = vpop.f32.mrb[0].mxu0
        %1061 = vdwg.mxu0
        %1062 = vmatprep.subr.mxu0 0.0
        %1063 = vmatpush1.msra.mxu0 %v878
        %1064 = vmatprep.subr.mxu0 0.0
        %1065 = vmatpush1.msra.mxu0 %v879
        %1066 = vmatprep.subr.mxu0 0.0
        %1067 = vmatpush1.msra.mxu0 %v880
        %1068 = vmatprep.subr.mxu0 0.0
        %1069 = vmatpush1.msra.mxu0 %v881
        %1070 = vmatprep.subr.mxu0 0.0
        %1071 = vmatpush1.msra.mxu0 %v882
        %1072 = vmatprep.subr.mxu0 0.0
        %1073 = vmatpush1.msra.mxu0 %v883
        %1074 = vmatprep.subr.mxu0 0.0
        %1075 = vmatpush1.msra.mxu0 %v884
        %1076 = vmatprep.subr.mxu0 0.0
        %1077 = vmatpush1.msra.mxu0 %v885
        %1078 = vmatprep.subr.mxu0 0.0
        %1079 = vmatpush1.msra.mxu0 %v886
        %1080 = vmatprep.subr.mxu0 0.0
        %1081 = vmatpush1.msra.mxu0 %v887
        %1082 = vmatprep.subr.mxu0 0.0
        %1083 = vmatpush1.msra.mxu0 %v888
        %1084 = vmatprep.subr.mxu0 0.0
        %1085 = vmatpush1.msra.mxu0 %v889
        %1086 = vmatprep.subr.mxu0 0.0
        %1087 = vmatpush1.msra.mxu0 %v890
        %1088 = vmatprep.subr.mxu0 0.0
        %1089 = vmatpush1.msra.mxu0 %v891
        %1090 = vmatprep.subr.mxu0 0.0
        %1091 = vmatpush1.msra.mxu0 %v892
        %1092 = vmatprep.subr.mxu0 0.0
        %1093 = vmatpush1.msra.mxu0 %v893
        %1094 = vmatprep.subr.mxu0 0.0
        %1095 = vmatpush1.msra.mxu0 %v894
        %1096 = vmatprep.subr.mxu0 0.0
        %1097 = vmatpush1.msra.mxu0 %v895
        %1098 = vmatprep.subr.mxu0 0.0
        %1099 = vmatpush1.msra.mxu0 %v896
        %1100 = vmatprep.subr.mxu0 0.0
        %1101 = vmatpush1.msra.mxu0 %v897
        %1102 = vmatprep.subr.mxu0 0.0
        %1103 = vmatpush1.msra.mxu0 %v898
        %1104 = vmatprep.subr.mxu0 0.0
        %1105 = vmatpush1.msra.mxu0 %v899
        %1106 = vmatprep.subr.mxu0 0.0
        %1107 = vmatpush1.msra.mxu0 %v900
        %1108 = vmatprep.subr.mxu0 0.0
        %1109 = vmatpush1.msra.mxu0 %v901
        %1110 = vmatprep.subr.mxu0 0.0
        %1111 = vmatpush1.msra.mxu0 %v902
        %1112 = vmatprep.subr.mxu0 0.0
        %1113 = vmatpush1.msra.mxu0 %v903
        %1114 = vmatprep.subr.mxu0 0.0
        %1115 = vmatpush1.msra.mxu0 %v904
        %1116 = vmatprep.subr.mxu0 0.0
        %1117 = vmatpush1.msra.mxu0 %v905
        %1118 = vmatprep.subr.mxu0 0.0
        %1119 = vmatpush1.msra.mxu0 %v906
        %1120 = vmatprep.subr.mxu0 0.0
        %1121 = vmatpush1.msra.mxu0 %v907
        %1122 = vmatprep.subr.mxu0 0.0
        %1123 = vmatpush1.msra.mxu0 %v908
        %1124 = vmatprep.subr.mxu0 0.0
        %1125 = vmatpush1.msra.mxu0 %v909
        %1126 = vmatprep.mubr.f32.mxu0 %v785
        %1127 = vmatmul.mubr.f32.gmra.mrb[0].mxu0 %v784
        %v1128 = vpop.f32.mrb[0].mxu0
        %v1129 = vadd.f32 %v984, %v1128
        %v1130 = vpop.f32.mrb[0].mxu0
        %1131 = vmatprep.mubr.f32.mxu0 %v789
        %1132 = vmatmul.mubr.f32.gmra.mrb[0].mxu0 %v788
        %v1133 = vpop.f32.mrb[0].mxu0
        %v1134 = vadd.f32 %v989, %v1133
        %v1135 = vpop.f32.mrb[0].mxu0
        %1136 = vmatprep.mubr.f32.mxu0 %v793
        %1137 = vmatmul.mubr.f32.gmra.mrb[0].mxu0 %v792
        %v1138 = vpop.f32.mrb[0].mxu0
        %v1139 = vadd.f32 %v994, %v1138
        %v1140 = vpop.f32.mrb[0].mxu0
        %1141 = vmatprep.mubr.f32.mxu0 %v797
        %1142 = vmatmul.mubr.f32.gmra.mrb[0].mxu0 %v796
        %v1143 = vpop.f32.mrb[0].mxu0
        %v1144 = vadd.f32 %v999, %v1143
        %v1145 = vpop.f32.mrb[0].mxu0
        %1146 = vmatprep.mubr.f32.mxu0 %v801
        %1147 = vmatmul.mubr.f32.gmra.mrb[0].mxu0 %v800
        %v1148 = vpop.f32.mrb[0].mxu0
        %v1149 = vadd.f32 %v1004, %v1148
        %v1150 = vpop.f32.mrb[0].mxu0
        %1151 = vmatprep.mubr.f32.mxu0 %v805
        %1152 = vmatmul.mubr.f32.gmra.mrb[0].mxu0 %v804
        %v1153 = vpop.f32.mrb[0].mxu0
        %v1154 = vadd.f32 %v1009, %v1153
        %v1155 = vpop.f32.mrb[0].mxu0
        %1156 = vmatprep.mubr.f32.mxu0 %v809
        %1157 = vmatmul.mubr.f32.gmra.mrb[0].mxu0 %v808
        %v1158 = vpop.f32.mrb[0].mxu0
        %v1159 = vadd.f32 %v1014, %v1158
        %v1160 = vpop.f32.mrb[0].mxu0
        %1161 = vmatprep.mubr.f32.mxu0 %v813
        %1162 = vmatmul.mubr.f32.gmra.mrb[0].mxu0 %v812
        %v1163 = vpop.f32.mrb[0].mxu0
        %v1164 = vadd.f32 %v1019, %v1163
        %v1165 = vpop.f32.mrb[0].mxu0
        %1166 = vmatprep.mubr.f32.mxu0 %v817
        %1167 = vmatmul.mubr.f32.gmra.mrb[0].mxu0 %v816
        %v1168 = vpop.f32.mrb[0].mxu0
        %v1169 = vadd.f32 %v1024, %v1168
        %v1170 = vpop.f32.mrb[0].mxu0
        %1171 = vmatprep.mubr.f32.mxu0 %v821
        %1172 = vmatmul.mubr.f32.gmra.mrb[0].mxu0 %v820
        %v1173 = vpop.f32.mrb[0].mxu0
        %v1174 = vadd.f32 %v1029, %v1173
        %v1175 = vpop.f32.mrb[0].mxu0
        %1176 = vmatprep.mubr.f32.mxu0 %v825
        %1177 = vmatmul.mubr.f32.gmra.mrb[0].mxu0 %v824
        %v1178 = vpop.f32.mrb[0].mxu0
        %v1179 = vadd.f32 %v1034, %v1178
        %v1180 = vpop.f32.mrb[0].mxu0
        %1181 = vmatprep.mubr.f32.mxu0 %v829
        %1182 = vmatmul.mubr.f32.gmra.mrb[0].mxu0 %v828
        %v1183 = vpop.f32.mrb[0].mxu0
        %v1184 = vadd.f32 %v1039, %v1183
        %v1185 = vpop.f32.mrb[0].mxu0
        %1186 = vmatprep.mubr.f32.mxu0 %v833
        %1187 = vmatmul.mubr.f32.gmra.mrb[0].mxu0 %v832
        %v1188 = vpop.f32.mrb[0].mxu0
        %v1189 = vadd.f32 %v1044, %v1188
        %v1190 = vpop.f32.mrb[0].mxu0
        %1191 = vmatprep.mubr.f32.mxu0 %v837
        %1192 = vmatmul.mubr.f32.gmra.mrb[0].mxu0 %v836
        %v1193 = vpop.f32.mrb[0].mxu0
        %v1194 = vadd.f32 %v1049, %v1193
        %v1195 = vpop.f32.mrb[0].mxu0
        %1196 = vmatprep.mubr.f32.mxu0 %v841
        %1197 = vmatmul.mubr.f32.gmra.mrb[0].mxu0 %v840
        %v1198 = vpop.f32.mrb[0].mxu0
        %v1199 = vadd.f32 %v1054, %v1198
        %v1200 = vpop.f32.mrb[0].mxu0
        %1201 = vmatprep.mubr.f32.mxu0 %v845
        %1202 = vmatmul.mubr.f32.gmra.mrb[0].mxu0 %v844
        %v1203 = vpop.f32.mrb[0].mxu0
        %v1204 = vadd.f32 %v1059, %v1203
        %v1205 = vpop.f32.mrb[0].mxu0
        %1206 = vdwg.mxu0
        %v1207 = vtanh.pop %v1129
        %v1208 = vtanh.pop %v1134
        %v1209 = vtanh.pop %v1139
        %v1210 = vtanh.pop %v1144
        %v1211 = vtanh.pop %v1149
        %v1212 = vtanh.pop %v1154
        %v1213 = vtanh.pop %v1159
        %v1214 = vtanh.pop %v1164
        %v1215 = vtanh.pop %v1169
        %v1216 = vtanh.pop %v1174
        %v1217 = vtanh.pop %v1179
        %v1218 = vtanh.pop %v1184
        %v1219 = vtanh.pop %v1189
        %v1220 = vtanh.pop %v1194
        %v1221 = vtanh.pop %v1199
        %v1222 = vtanh.pop %v1204
        %v1223 = vmax.f32 %v1207, -0.9999
        %v1224 = vmax.f32 %v1208, -0.9999
        %v1225 = vmax.f32 %v1209, -0.9999
        %v1226 = vmax.f32 %v1210, -0.9999
        %v1227 = vmax.f32 %v1211, -0.9999
        %v1228 = vmax.f32 %v1212, -0.9999
        %v1229 = vmax.f32 %v1213, -0.9999
        %v1230 = vmax.f32 %v1214, -0.9999
        %v1231 = vmax.f32 %v1215, -0.9999
        %v1232 = vmax.f32 %v1216, -0.9999
        %v1233 = vmax.f32 %v1217, -0.9999
        %v1234 = vmax.f32 %v1218, -0.9999
        %v1235 = vmax.f32 %v1219, -0.9999
        %v1236 = vmax.f32 %v1220, -0.9999
        %v1237 = vmax.f32 %v1221, -0.9999
        %v1238 = vmax.f32 %v1222, -0.9999
        %v1239 = vmin.f32 %v1223, 0.9999
        %v1240 = vmin.f32 %v1224, 0.9999
        %v1241 = vmin.f32 %v1225, 0.9999
        %v1242 = vmin.f32 %v1226, 0.9999
        %v1243 = vmin.f32 %v1227, 0.9999
        %v1244 = vmin.f32 %v1228, 0.9999
        %v1245 = vmin.f32 %v1229, 0.9999
        %v1246 = vmin.f32 %v1230, 0.9999
        %v1247 = vmin.f32 %v1231, 0.9999
        %v1248 = vmin.f32 %v1232, 0.9999
        %v1249 = vmin.f32 %v1233, 0.9999
        %v1250 = vmin.f32 %v1234, 0.9999
        %v1251 = vmin.f32 %v1235, 0.9999
        %v1252 = vmin.f32 %v1236, 0.9999
        %v1253 = vmin.f32 %v1237, 0.9999
        %v1254 = vmin.f32 %v1238, 0.9999
        %1255 = vst [vmem:[%s272] sm:$0xff] %v1239
        %1256 = vst [vmem:[%s272 + $0x8] sm:$0xff] %v1240
        %1257 = vst [vmem:[%s272 + $0x10] sm:$0xff] %v1241
        %1258 = vst [vmem:[%s272 + $0x18] sm:$0xff] %v1242
        %1259 = vst [vmem:[%s272 + $0x20] sm:$0xff] %v1243
        %1260 = vst [vmem:[%s272 + $0x28] sm:$0xff] %v1244
        %1261 = vst [vmem:[%s272 + $0x30] sm:$0xff] %v1245
        %1262 = vst [vmem:[%s272 + $0x38] sm:$0xff] %v1246
        %1263 = vst [vmem:[%s272 + $0x40] sm:$0xff] %v1247
        %1264 = vst [vmem:[%s272 + $0x48] sm:$0xff] %v1248
        %1265 = vst [vmem:[%s272 + $0x50] sm:$0xff] %v1249
        %1266 = vst [vmem:[%s272 + $0x58] sm:$0xff] %v1250
        %1267 = vst [vmem:[%s272 + $0x60] sm:$0xff] %v1251
        %1268 = vst [vmem:[%s272 + $0x68] sm:$0xff] %v1252
        %1269 = vst [vmem:[%s272 + $0x70] sm:$0xff] %v1253
        %1270 = vst [vmem:[%s272 + $0x78] sm:$0xff] %v1254
        %s1271 = sand.u32 %s141, 1
        %s1272 = scalar_lea.sflag [#allocation4], %s1271
        %s1273 = sand.u32 %s141, 1
        %s1274 = smul.addr %s1273, 128
        %s1275 = scalar_lea.vmem [#allocation8], %s1274
        // Predicated region
        $region53: #{tpu_custom_call.1} parent=39 // pred_check
          %p1276 = pneg %p151
        $region54: #{tpu_custom_call.1} parent=39 // pred_check_branch
          %1278 = sbr.rel (%p1276) target = $region56
        $region55: #{tpu_custom_call.1} parent=39 // pred_region
          %s1279 = smul.u32 16, %s23
          %s1281 = ssub.s32 2048, 2048
          %1282 = vsyncadd %s1272, %s1281
          %s1283 = smul.addr %s1279, 128
          %s1284 = scalar_lea.hbm %s5, %s1283
          %s1285 = sshll.u32 %s1275, 4
          %s1286 = int_to_ptr.vmem [resolvable:$true] %s1285
          %1291 = dma.vmem_to_hbm [thread:$0]  %s1286, 2048, %s1284, %s1272, 128, 128, 8
        $region56: #{tpu_custom_call.1} parent=39 // pred_fallthru
          _
      $region40: #{tpu_custom_call.1} parent=5 // pred_fallthru
        _
      %p1292 = scmp.le.s32.totalorder 2, %s18
      // Predicated region
      $region57: #{tpu_custom_call.1} parent=5 // pred_check
        %p1293 = pneg %p1292
      $region58: #{tpu_custom_call.1} parent=5 // pred_check_branch
        %1295 = sbr.rel (%p1293) target = $region60
      $region59: #{tpu_custom_call.1} parent=5 // pred_region
        %s1296 = ssub.s32 %s18, 2
        // Predicated region
        $region61: #{tpu_custom_call.1} parent=59 // pred_check
          %p1297 = pneg %p157
        $region62: #{tpu_custom_call.1} parent=59 // pred_check_branch
          %1299 = sbr.rel (%p1297) target = $region64
        $region63: #{tpu_custom_call.1} parent=59 // pred_region
          %s1300 = sand.u32 %s142, 1
          %s1301 = scalar_lea.sflag [#allocation4], %s1300
          %s1302 = sand.u32 %s142, 1
          %s1303 = smul.addr %s1302, 128
          %s1304 = scalar_lea.vmem [#allocation8], %s1303
          %1305 = dma.done %s1301, 2048
        $region64: #{tpu_custom_call.1} parent=59 // pred_fallthru
          _
      $region60: #{tpu_custom_call.1} parent=5 // pred_fallthru
        _
    $region6: #{tpu_custom_call.1} parent=1 // loop_footer
      %s22 = sadd.s32 1, %s18
    $region7: #{tpu_custom_call.1} parent=1 // loop_footer_branch
      %17 = sbr.rel target = $region3
    $region8: #{tpu_custom_call.1} parent=1 // loop_exit
      _
    %1306 = vsyncpa [#allocation3], 1
    %s1307 = scalar_lea.sflag [#allocation3], 1
    %1308 = vsyncpa %s1307, 1
    %1309 = vsyncpa [#allocation6], 1
    %1310 = vsyncpa [#allocation4], 1
    %s1311 = scalar_lea.sflag [#allocation4], 1
    %1312 = vsyncpa %s1311, 1

</llo_original>
